<compile_context>
chip_gen: v5e
topology: v5e:2x2
jax: 0.10.0
libtpu: 0.0.40
codegen_flags: <defaults>
</compile_context>

<pallas_src>
import jax
import jax.numpy as jnp
from jax.experimental import pallas as pl
from jax.experimental.pallas import tpu as pltpu


def _round_up(v: int, m: int) -> int:
    return (v + m - 1) // m * m


def _padded_block_bytes(shape, itemsize, buffers=1):
    """Rough VMEM footprint of a block (last dim -> 128 lanes, 2nd-last -> 8 sublanes)."""
    s = list(shape)
    if len(s) >= 1:
        s[-1] = _round_up(s[-1], 128)
    if len(s) >= 2:
        s[-2] = _round_up(s[-2], 8)
    n = itemsize
    for d in s:
        n *= d
    return n * buffers


def _vmem_limit_bytes(resident_bytes: int) -> int:
    """Explicit scoped-VMEM limit: resident blocks + headroom, capped at 3/4 of physical."""
    try:
        cap = int(pltpu.get_tpu_info().vmem_capacity_bytes)
    except Exception:
        cap = 64 << 20            # v7x per-TensorCore VMEM (most restrictive generation)
    want = max(int(resident_bytes) + (8 << 20), 32 << 20)
    return int(min(want, (cap * 3) // 4))


def _conv3x3_fused_kernel(x_ref, w_ref, o_ref, col_ref):
    """One image x one OC tile of a 3x3 / stride-1 / pad-1 conv (+ bias).

    x_ref:   (1, H+2, W+2, C)  zero-padded NHWC activations for one image
    w_ref:   (J, K, TOC)       K = 9*C + 1; row 9*C of each tile is the bias
    o_ref:   (1, H*W, TOC)     output tile, row-major over (h, w)
    col_ref: (H*W, K)          persistent im2col slab (+ trailing ones column)
    """
    H = x_ref.shape[1] - 2
    W = x_ref.shape[2] - 2
    C = x_ref.shape[3]
    HW = H * W
    j = pl.program_id(1)

    # Build the im2col slab once per image (first OC tile) and reuse it for all
    # OC tiles: the shifted-patch reshapes are VMEM copies, so redoing them for
    # every tile would be pure waste.
    @pl.when(j == 0)
    def _build_slab():
        for t in range(9):
            ky, kx = divmod(t, 3)
            col_ref[:, t * C:(t + 1) * C] = (
                x_ref[0, ky:ky + H, kx:kx + W, :].reshape(HW, C))
        # Ones column so the bias row of w_ref is applied by the MXU itself.
        col_ref[:, 9 * C:9 * C + 1] = jnp.ones((HW, 1), dtype=col_ref.dtype)

    # Single K = 9*C+1 MXU contraction (f32 accumulation): conv + bias in one shot.
    o_ref[0] = jnp.dot(col_ref[...], w_ref[j],
                       preferred_element_type=jnp.float32).astype(o_ref.dtype)


def conv3x3_same(x_nchw, w_hwio, bias, *, compute_dtype=jnp.bfloat16):
    """3x3 stride-1 pad-1 conv + bias via a fused Pallas kernel.

    x_nchw: (N, C, H, W), w_hwio: (3, 3, C, OC), bias: (OC,)
    returns (N, H*W, OC) with channels-last (NHWC) row-major spatial order.
    """
    N, C, H, W = x_nchw.shape
    OC = w_hwio.shape[-1]
    out_dtype = x_nchw.dtype
    HW = H * W
    K = 9 * C + 1                                    # +1 row for the fused bias

    cdt = jnp.dtype(compute_dtype) if compute_dtype is not None else jnp.dtype(out_dtype)

    # NHWC + halo pad: one cheap XLA pass; the 9x im2col slab lives only in VMEM.
    x = jnp.transpose(x_nchw, (0, 2, 3, 1))
    xp = jnp.pad(x, ((0, 0), (1, 1), (1, 1), (0, 0))).astype(cdt)

    # Weights in matmul layout with the bias appended as the final K row.
    w2 = jnp.concatenate(
        [w_hwio.reshape(9 * C, OC), bias.reshape(1, OC).astype(w_hwio.dtype)],
        axis=0).astype(cdt)

    # Small heads (box regression, OC ~ 16-24): keep the true OC as the output
    # last dim -- no 128-lane padding, no wrapper de-pad pass.  Only large class
    # heads are padded/tiled, with TOC = 256 for the 256-wide v6e/v7x MXU.
    if OC <= 512:
        TOC, OC_pad = OC, OC
    else:
        TOC = 256
        OC_pad = _round_up(OC, TOC)
        w2 = jnp.pad(w2, ((0, 0), (0, OC_pad - OC)))
    J = OC_pad // TOC
    # (K, OC_pad) -> (J, K, TOC); the constant index_map below keeps the whole
    # weight slab VMEM-resident for the entire call (loaded once, not N times).
    w3 = w2.reshape(K, J, TOC).transpose(1, 0, 2)

    out_itemsize = jnp.dtype(out_dtype).itemsize
    resident = (
        _padded_block_bytes((1, H + 2, W + 2, C), cdt.itemsize, buffers=2)   # image
        + _padded_block_bytes((J, K, TOC), cdt.itemsize, buffers=2)          # weights
        + _padded_block_bytes((1, HW, TOC), out_itemsize, buffers=2)         # out tile
        + _padded_block_bytes((HW, K), cdt.itemsize, buffers=1)              # im2col slab
    )
    # TODO(synk): add an H-row grid axis (with a 1-row halo) for very large
    # pyramid levels so slab/output blocks stay comfortably under v7x's 64 MiB VMEM.

    out = pl.pallas_call(
        _conv3x3_fused_kernel,
        out_shape=jax.ShapeDtypeStruct((N, HW, OC_pad), out_dtype),
        grid_spec=pltpu.PrefetchScalarGridSpec(
            num_scalar_prefetch=0,
            grid=(N, J),                        # OC-tile axis innermost (slab reuse)
            in_specs=[
                pl.BlockSpec((1, H + 2, W + 2, C), lambda n, j: (n, 0, 0, 0)),
                pl.BlockSpec((J, K, TOC), lambda n, j: (0, 0, 0)),
            ],
            out_specs=pl.BlockSpec((1, HW, TOC), lambda n, j: (n, 0, j)),
            scratch_shapes=[pltpu.VMEM((HW, K), cdt)],
        ),
        compiler_params=pltpu.CompilerParams(
            # Batch axis is megacore-shardable; the OC-tile axis carries the
            # im2col scratch, so it must stay sequential ("arbitrary").
            dimension_semantics=("parallel", "arbitrary"),
            vmem_limit_bytes=_vmem_limit_bytes(resident),
        ),
    )(xp, w3)

    if OC_pad != OC:
        out = out[:, :, :OC]                    # strip padded lanes (class head only)
    return out


def ssd_scoring_head(xs, params, num_columns, *, compute_dtype=jnp.bfloat16):
    """xs: list of NCHW feature maps; params: list of (w_hwio (3,3,C,OC), bias (OC,))."""
    # TODO(synk): fuse all pyramid levels into one pallas_call (scalar-prefetched
    # per-level M offsets) and write straight into the concatenated output to drop
    # per-call overhead for tiny levels and the final concat copy.
    all_results = []
    for x, (w, b) in zip(xs, params):
        N, _, H, Wd = x.shape
        OC = w.shape[-1]
        A = OC // num_columns
        y = conv3x3_same(x, w, b, compute_dtype=compute_dtype)   # (N, H*W, OC)
        # PyTorch: view(N, A, K, H, W) -> permute(0,3,4,1,2) -> reshape(N, H*W*A, K).
        # In channels-last the channel dim is already (A, K)-ordered.
        r = y.reshape(N, H * Wd, A, num_columns).reshape(N, H * Wd * A, num_columns)
        all_results.append(r)
    return jnp.concatenate(all_results, axis=1)


def ssd_scoring_head_ref(xs, params, num_columns, compute_dtype=None):
    """Pure-JAX reference (lax conv).  If compute_dtype is given, inputs/weights/bias
    are rounded through it first so a bf16 kernel can be checked tightly."""
    outs = []
    for x, (w, b) in zip(xs, params):
        if compute_dtype is not None:
            x = x.astype(compute_dtype).astype(jnp.float32)
            w = w.astype(compute_dtype).astype(jnp.float32)
            b = b.astype(compute_dtype).astype(jnp.float32)
        N = x.shape[0]
        xh = jnp.transpose(x, (0, 2, 3, 1))
        y = jax.lax.conv_general_dilated(
            xh, w, window_strides=(1, 1), padding="SAME",
            dimension_numbers=("NHWC", "HWIO", "NHWC"),
            precision=jax.lax.Precision.HIGHEST) + b
        H, Wd, OC = y.shape[1:]
        A = OC // num_columns
        outs.append(y.reshape(N, H * Wd, A, num_columns).reshape(N, H * Wd * A, num_columns))
    return jnp.concatenate(outs, axis=1)


if __name__ == "__main__":
    key = jax.random.PRNGKey(0)
    keys = jax.random.split(key, 10)

    # --- Test 1: small box-regression-style head, f32 compute (tight check),
    #     exercises the unpadded small-OC path across two pyramid levels. ---
    num_columns = 4
    num_anchors = 4
    OC = num_anchors * num_columns            # 16 -> no lane padding, single OC tile
    N = 2
    in_channels = [4, 8]
    spatial = [16, 8]

    xs, params = [], []
    for li, (c, s) in enumerate(zip(in_channels, spatial)):
        xs.append(jax.random.normal(keys[3 * li + 0], (N, c, s, s), dtype=jnp.float32))
        w = 0.05 * jax.random.normal(keys[3 * li + 1], (3, 3, c, OC), dtype=jnp.float32)
        b = 0.05 * jax.random.normal(keys[3 * li + 2], (OC,), dtype=jnp.float32)
        params.append((w, b))

    out = ssd_scoring_head(xs, params, num_columns, compute_dtype=None)
    out = jax.block_until_ready(out)
    expected_rows = sum(s * s * num_anchors for s in spatial)
    assert out.shape == (N, expected_rows, num_columns), out.shape
    ref = ssd_scoring_head_ref(xs, params, num_columns)
    assert jnp.allclose(out, ref, atol=2e-3, rtol=2e-3), "f32 path mismatch vs reference"

    # --- Test 2: classification-style head (OC = 546 > 512 -> padded to 768,
    #     TOC = 256, 3 OC tiles), default bf16 compute, slab reuse across tiles
    #     and rebuild across images. ---
    num_columns_c = 91
    num_anchors_c = 6
    OC_c = num_anchors_c * num_columns_c       # 546
    C_c, S_c, N_c = 64, 8, 2
    x_c = jax.random.normal(keys[6], (N_c, C_c, S_c, S_c), dtype=jnp.float32)
    w_c = 0.05 * jax.random.normal(keys[7], (3, 3, C_c, OC_c), dtype=jnp.float32)
    b_c = 0.05 * jax.random.normal(keys[8], (OC_c,), dtype=jnp.float32)

    out_c = ssd_scoring_head([x_c], [(w_c, b_c)], num_columns_c)   # bf16 default
    out_c = jax.block_until_ready(out_c)
    assert out_c.shape == (N_c, S_c * S_c * num_anchors_c, num_columns_c), out_c.shape
    ref_c = ssd_scoring_head_ref([x_c], [(w_c, b_c)], num_columns_c,
                                 compute_dtype=jnp.bfloat16)
    assert jnp.allclose(out_c, ref_c, atol=5e-3, rtol=5e-3), "bf16 path mismatch vs reference"

    print("KERNEL_OK")
</pallas_src>

<mosaic_0001>
module attributes {stable_mosaic.version = 11 : i64} {
  func.func @_conv3x3_fused_kernel(%arg0: i32, %arg1: i32, %arg2: memref<1x18x18x4xf32, #tpu.memory_space<vmem>>, %arg3: memref<1x37x16xf32, #tpu.memory_space<vmem>>, %arg4: memref<1x256x16xf32, #tpu.memory_space<vmem>>, %arg5: memref<256x37xf32, #tpu.memory_space<vmem>>) attributes {dimension_semantics = [#tpu.dimension_semantics<parallel>, #tpu.dimension_semantics<arbitrary>], iteration_bounds = array<i64: 2, 1>, scalar_prefetch = 0 : i64, scratch_operands = 1 : i64, tpu.core_type = #tpu.core_type<tc>, window_params = [{transform_indices = @transform_0, window_bounds = array<i64: 1, 18, 18, 4>}, {pipeline_mode = #tpu.pipeline_mode<synchronous>, transform_indices = @transform_1, window_bounds = array<i64: 1, 37, 16>}, {transform_indices = @transform_2, window_bounds = array<i64: 1, 256, 16>}]} {
    %c0_i32 = arith.constant 0 : i32
    %0 = arith.cmpi eq, %arg1, %c0_i32 : i32
    %1 = arith.extui %0 : i1 to i32
    %c0_i32_0 = arith.constant 0 : i32
    %2 = arith.cmpi ne, %1, %c0_i32_0 : i32
    scf.if %2 {
      %c0_7 = arith.constant 0 : index
      %c0_8 = arith.constant 0 : index
      %c0_9 = arith.constant 0 : index
      %c0_10 = arith.constant 0 : index
      %11 = vector.load %arg2[%c0_7, %c0_8, %c0_9, %c0_10] : memref<1x18x18x4xf32, #tpu.memory_space<vmem>>, vector<1x16x16x4xf32>
      %12 = vector.shape_cast %11 : vector<1x16x16x4xf32> to vector<16x16x4xf32>
      %13 = vector.shape_cast %12 : vector<16x16x4xf32> to vector<256x4xf32>
      %c0_11 = arith.constant 0 : index
      %c0_12 = arith.constant 0 : index
      %14 = vector.load %arg5[%c0_11, %c0_12] : memref<256x37xf32, #tpu.memory_space<vmem>>, vector<256x4xf32>
      tpu.vector_store %arg5[%c0_11, %c0_12], %13 {strides = array<i32>} : memref<256x37xf32, #tpu.memory_space<vmem>>, vector<256x4xf32>,
      %c0_13 = arith.constant 0 : index
      %c0_14 = arith.constant 0 : index
      %c1 = arith.constant 1 : index
      %c0_15 = arith.constant 0 : index
      %15 = vector.load %arg2[%c0_13, %c0_14, %c1, %c0_15] : memref<1x18x18x4xf32, #tpu.memory_space<vmem>>, vector<1x16x16x4xf32>
      %16 = vector.shape_cast %15 : vector<1x16x16x4xf32> to vector<16x16x4xf32>
      %17 = vector.shape_cast %16 : vector<16x16x4xf32> to vector<256x4xf32>
      %c0_16 = arith.constant 0 : index
      %c4 = arith.constant 4 : index
      %18 = vector.load %arg5[%c0_16, %c4] : memref<256x37xf32, #tpu.memory_space<vmem>>, vector<256x4xf32>
      tpu.vector_store %arg5[%c0_16, %c4], %17 {strides = array<i32>} : memref<256x37xf32, #tpu.memory_space<vmem>>, vector<256x4xf32>,
      %c0_17 = arith.constant 0 : index
      %c0_18 = arith.constant 0 : index
      %c2 = arith.constant 2 : index
      %c0_19 = arith.constant 0 : index
      %19 = vector.load %arg2[%c0_17, %c0_18, %c2, %c0_19] : memref<1x18x18x4xf32, #tpu.memory_space<vmem>>, vector<1x16x16x4xf32>
      %20 = vector.shape_cast %19 : vector<1x16x16x4xf32> to vector<16x16x4xf32>
      %21 = vector.shape_cast %20 : vector<16x16x4xf32> to vector<256x4xf32>
      %c0_20 = arith.constant 0 : index
      %c8 = arith.constant 8 : index
      %22 = vector.load %arg5[%c0_20, %c8] : memref<256x37xf32, #tpu.memory_space<vmem>>, vector<256x4xf32>
      tpu.vector_store %arg5[%c0_20, %c8], %21 {strides = array<i32>} : memref<256x37xf32, #tpu.memory_space<vmem>>, vector<256x4xf32>,
      %c0_21 = arith.constant 0 : index
      %c1_22 = arith.constant 1 : index
      %c0_23 = arith.constant 0 : index
      %c0_24 = arith.constant 0 : index
      %23 = vector.load %arg2[%c0_21, %c1_22, %c0_23, %c0_24] : memref<1x18x18x4xf32, #tpu.memory_space<vmem>>, vector<1x16x16x4xf32>
      %24 = vector.shape_cast %23 : vector<1x16x16x4xf32> to vector<16x16x4xf32>
      %25 = vector.shape_cast %24 : vector<16x16x4xf32> to vector<256x4xf32>
      %c0_25 = arith.constant 0 : index
      %c12 = arith.constant 12 : index
      %26 = vector.load %arg5[%c0_25, %c12] : memref<256x37xf32, #tpu.memory_space<vmem>>, vector<256x4xf32>
      tpu.vector_store %arg5[%c0_25, %c12], %25 {strides = array<i32>} : memref<256x37xf32, #tpu.memory_space<vmem>>, vector<256x4xf32>,
      %c0_26 = arith.constant 0 : index
      %c1_27 = arith.constant 1 : index
      %c1_28 = arith.constant 1 : index
      %c0_29 = arith.constant 0 : index
      %27 = vector.load %arg2[%c0_26, %c1_27, %c1_28, %c0_29] : memref<1x18x18x4xf32, #tpu.memory_space<vmem>>, vector<1x16x16x4xf32>
      %28 = vector.shape_cast %27 : vector<1x16x16x4xf32> to vector<16x16x4xf32>
      %29 = vector.shape_cast %28 : vector<16x16x4xf32> to vector<256x4xf32>
      %c0_30 = arith.constant 0 : index
      %c16 = arith.constant 16 : index
      %30 = vector.load %arg5[%c0_30, %c16] : memref<256x37xf32, #tpu.memory_space<vmem>>, vector<256x4xf32>
      tpu.vector_store %arg5[%c0_30, %c16], %29 {strides = array<i32>} : memref<256x37xf32, #tpu.memory_space<vmem>>, vector<256x4xf32>,
      %c0_31 = arith.constant 0 : index
      %c1_32 = arith.constant 1 : index
      %c2_33 = arith.constant 2 : index
      %c0_34 = arith.constant 0 : index
      %31 = vector.load %arg2[%c0_31, %c1_32, %c2_33, %c0_34] : memref<1x18x18x4xf32, #tpu.memory_space<vmem>>, vector<1x16x16x4xf32>
      %32 = vector.shape_cast %31 : vector<1x16x16x4xf32> to vector<16x16x4xf32>
      %33 = vector.shape_cast %32 : vector<16x16x4xf32> to vector<256x4xf32>
      %c0_35 = arith.constant 0 : index
      %c20 = arith.constant 20 : index
      %34 = vector.load %arg5[%c0_35, %c20] : memref<256x37xf32, #tpu.memory_space<vmem>>, vector<256x4xf32>
      tpu.vector_store %arg5[%c0_35, %c20], %33 {strides = array<i32>} : memref<256x37xf32, #tpu.memory_space<vmem>>, vector<256x4xf32>,
      %c0_36 = arith.constant 0 : index
      %c2_37 = arith.constant 2 : index
      %c0_38 = arith.constant 0 : index
      %c0_39 = arith.constant 0 : index
      %35 = vector.load %arg2[%c0_36, %c2_37, %c0_38, %c0_39] : memref<1x18x18x4xf32, #tpu.memory_space<vmem>>, vector<1x16x16x4xf32>
      %36 = vector.shape_cast %35 : vector<1x16x16x4xf32> to vector<16x16x4xf32>
      %37 = vector.shape_cast %36 : vector<16x16x4xf32> to vector<256x4xf32>
      %c0_40 = arith.constant 0 : index
      %c24 = arith.constant 24 : index
      %38 = vector.load %arg5[%c0_40, %c24] : memref<256x37xf32, #tpu.memory_space<vmem>>, vector<256x4xf32>
      tpu.vector_store %arg5[%c0_40, %c24], %37 {strides = array<i32>} : memref<256x37xf32, #tpu.memory_space<vmem>>, vector<256x4xf32>,
      %c0_41 = arith.constant 0 : index
      %c2_42 = arith.constant 2 : index
      %c1_43 = arith.constant 1 : index
      %c0_44 = arith.constant 0 : index
      %39 = vector.load %arg2[%c0_41, %c2_42, %c1_43, %c0_44] : memref<1x18x18x4xf32, #tpu.memory_space<vmem>>, vector<1x16x16x4xf32>
      %40 = vector.shape_cast %39 : vector<1x16x16x4xf32> to vector<16x16x4xf32>
      %41 = vector.shape_cast %40 : vector<16x16x4xf32> to vector<256x4xf32>
      %c0_45 = arith.constant 0 : index
      %c28 = arith.constant 28 : index
      %42 = vector.load %arg5[%c0_45, %c28] : memref<256x37xf32, #tpu.memory_space<vmem>>, vector<256x4xf32>
      tpu.vector_store %arg5[%c0_45, %c28], %41 {strides = array<i32>} : memref<256x37xf32, #tpu.memory_space<vmem>>, vector<256x4xf32>,
      %c0_46 = arith.constant 0 : index
      %c2_47 = arith.constant 2 : index
      %c2_48 = arith.constant 2 : index
      %c0_49 = arith.constant 0 : index
      %43 = vector.load %arg2[%c0_46, %c2_47, %c2_48, %c0_49] : memref<1x18x18x4xf32, #tpu.memory_space<vmem>>, vector<1x16x16x4xf32>
      %44 = vector.shape_cast %43 : vector<1x16x16x4xf32> to vector<16x16x4xf32>
      %45 = vector.shape_cast %44 : vector<16x16x4xf32> to vector<256x4xf32>
      %c0_50 = arith.constant 0 : index
      %c32 = arith.constant 32 : index
      %46 = vector.load %arg5[%c0_50, %c32] : memref<256x37xf32, #tpu.memory_space<vmem>>, vector<256x4xf32>
      tpu.vector_store %arg5[%c0_50, %c32], %45 {strides = array<i32>} : memref<256x37xf32, #tpu.memory_space<vmem>>, vector<256x4xf32>,
      %cst_51 = arith.constant 1.000000e+00 : f32
      %47 = vector.broadcast %cst_51 : f32 to vector<256x1xf32>
      %c0_52 = arith.constant 0 : index
      %c36 = arith.constant 36 : index
      %48 = vector.load %arg5[%c0_52, %c36] : memref<256x37xf32, #tpu.memory_space<vmem>>, vector<256x1xf32>
      tpu.vector_store %arg5[%c0_52, %c36], %47 {strides = array<i32>} : memref<256x37xf32, #tpu.memory_space<vmem>>, vector<256x1xf32>,
    } else {
    }
    %c0 = arith.constant 0 : index
    %c0_1 = arith.constant 0 : index
    %3 = vector.load %arg5[%c0, %c0_1] : memref<256x37xf32, #tpu.memory_space<vmem>>, vector<256x37xf32>
    %4 = arith.index_cast %arg1 : i32 to index
    %c0_2 = arith.constant 0 : index
    %c0_3 = arith.constant 0 : index
    %5 = vector.load %arg3[%4, %c0_2, %c0_3] : memref<1x37x16xf32, #tpu.memory_space<vmem>>, vector<1x37x16xf32>
    %6 = vector.shape_cast %5 : vector<1x37x16xf32> to vector<37x16xf32>
    %cst = arith.constant dense<0.000000e+00> : vector<256x16xf32>
    %7 = tpu.matmul %3, %6, %cst {dimension_numbers = #tpu.dot_dimension_numbers<[1], [0], [0], [1], [0, 0, 1, 1], [], []>} : vector<256x37xf32>, vector<37x16xf32>, vector<256x16xf32> -> vector<256x16xf32>
    %c0_4 = arith.constant 0 : index
    %c0_5 = arith.constant 0 : index
    %c0_6 = arith.constant 0 : index
    %8 = vector.load %arg4[%c0_4, %c0_5, %c0_6] : memref<1x256x16xf32, #tpu.memory_space<vmem>>, vector<1x256x16xf32>
    %9 = vector.shape_cast %8 : vector<1x256x16xf32> to vector<256x16xf32>
    %10 = vector.shape_cast %7 : vector<256x16xf32> to vector<1x256x16xf32>
    tpu.vector_store %arg4[%c0_4, %c0_5, %c0_6], %10 {strides = array<i32>} : memref<1x256x16xf32, #tpu.memory_space<vmem>>, vector<1x256x16xf32>,
    return
  }
  func.func @transform_0(%arg0: i32, %arg1: i32) -> (i32, i32, i32, i32) {
    %c0_i32 = arith.constant 0 : i32
    %c0_i32_0 = arith.constant 0 : i32
    %c0_i32_1 = arith.constant 0 : i32
    %c0_i32_2 = arith.constant 0 : i32
    return %arg0, %c0_i32, %c0_i32_0, %c0_i32_1 : i32, i32, i32, i32
  }
  func.func @transform_1(%arg0: i32, %arg1: i32) -> (i32, i32, i32) {
    %c0_i32 = arith.constant 0 : i32
    %c0_i32_0 = arith.constant 0 : i32
    %c0_i32_1 = arith.constant 0 : i32
    %c0_i32_2 = arith.constant 0 : i32
    return %c0_i32, %c0_i32_0, %c0_i32_1 : i32, i32, i32
  }
  func.func @transform_2(%arg0: i32, %arg1: i32) -> (i32, i32, i32) {
    %c0_i32 = arith.constant 0 : i32
    %c0_i32_0 = arith.constant 0 : i32
    return %arg0, %c0_i32, %arg1 : i32, i32, i32
  }
}

</mosaic_0001>

<llo_original>
// kernel: tpu_custom_call.1
$region0: #{tpu_custom_call.1}
  #allocation0 [shape = 'u32[]', space=smem, size = 0x4, offset = 0x4, fixed_abs, tag = 'smem constant byte address 0x4 - core index']
  #allocation1 [shape = 'u32[72,128]{1,0:T(1,128)}', space=vmem, size = 0x9000, scoped, tag = 'internal scratch']
  #allocation2 [shape = 'f32[256,37]{1,0:T(8,128)}', space=vmem, size = 0x20000, scoped, tag = 'scratch operand']
  %s0 = inlined_call_operand.vmem [shape: f32[2,18,18,4], index: 0, kind: input, shape index: {}]
  %s1 = inlined_call_operand.vmem [shape: f32[1,37,16], index: 1, kind: input, shape index: {}]
  %s2 = inlined_call_operand.vmem [shape: f32[2,256,16], index: 2, kind: output, shape index: {}]
  %s3 = sld [smem:[#allocation0]]
  $region45: #{tpu_custom_call.1} parent=0
    _
  %s5 = ssub.s32 1, %s3
  %s6 = scalar_select 0, %s5, %s3
  loop: start=0, step=1, limit=4
  $region2: #{tpu_custom_call.1} parent=0 // loop_pre_header
    _
  $region3: #{tpu_custom_call.1} parent=0 // loop_header
    %s8 = sphi 0, %s12
    %p9 = scmp.ge.s32.totalorder %s8, 4
    %s15 = sphi 0, %s27
    %s16 = sphi 0, %s23
    %s17 = sphi 0, %s15
    %s18 = sphi 0, %s16
    %s19 = sphi 0, %s17
    %s20 = sphi 0, %s18
    %s30 = sphi 0, %s32
    %s33 = sphi 0, %s30
    %s34 = sphi 0, %s33
    %s50 = sphi 0, %s34
    %s54 = sphi 0, %s54
    %s56 = sphi 0, %s54
    %s57 = sphi 0, %s56
    %s71 = sphi 0, %s57
    %s79 = sphi 0, %s81
    %s82 = sphi 0, %s79
    %s83 = sphi 0, %s82
    %s99 = sphi 0, %s83
  $region4: #{tpu_custom_call.1} parent=0 // loop_header_branch
    %11 = sbr.rel (%p9) target = $region8
  $region5: #{tpu_custom_call.1} parent=0 // loop_body
    %s13 = ssub.s32 %s8, 1
    %s14 = ssub.s32 %s8, 2
    %s21 = sadd.s32 1, %s16
    %p22 = scmp.ge.s32.totalorder %s21, 1
    %s23 = scalar_select %p22, 0, %s21
    %s24 = sadd.s32 1, %s15
    %s25 = scalar_select %p22, %s24, %s15
    %p26 = scmp.ge.s32.totalorder %s25, 2
    %s27 = scalar_select %p26, 0, %s25
    %s28 = ssub.s32 %s15, %s27
    %p29 = scmp.eq.s32.totalorder %s28, 0
    %s31 = sadd.s32 %s30, 1
    %s32 = scalar_select %p29, %s30, %s31
    %p35 = pneg %p29
    %p36 = scmp.eq.s32.totalorder %s8, 1
    %p37 = por %p35, %p36
    %p38 = scmp.ne.s32.totalorder %s30, %s33
    %p39 = scmp.eq.s32.totalorder %s8, 0
    %p40 = por %p38, %p39
    %p41 = scmp.ne.s32.totalorder %s30, %s33
    %p42 = scmp.eq.s32.totalorder %s13, 1
    %p43 = por %p41, %p42
    %p44 = scmp.ne.s32.totalorder %s33, %s34
    %p45 = scmp.eq.s32.totalorder %s13, 0
    %p46 = por %p44, %p45
    %p47 = scmp.ne.s32.totalorder %s33, %s34
    %p48 = scmp.eq.s32.totalorder %s14, 1
    %p49 = por %p47, %p48
    %p51 = scmp.ne.s32.totalorder %s34, %s50
    %p52 = scmp.eq.s32.totalorder %s14, 0
    %p53 = por %p51, %p52
    %s55 = sadd.s32 %s54, 1
    %p58 = scmp.eq.s32.totalorder %s8, 1
    %p59 = scmp.ne.s32.totalorder %s54, %s56
    %p60 = scmp.eq.s32.totalorder %s8, 0
    %p61 = por %p59, %p60
    %p62 = scmp.ne.s32.totalorder %s54, %s56
    %p63 = scmp.eq.s32.totalorder %s13, 1
    %p64 = por %p62, %p63
    %p65 = scmp.ne.s32.totalorder %s56, %s57
    %p66 = scmp.eq.s32.totalorder %s13, 0
    %p67 = por %p65, %p66
    %p68 = scmp.ne.s32.totalorder %s56, %s57
    %p69 = scmp.eq.s32.totalorder %s14, 1
    %p70 = por %p68, %p69
    %p72 = scmp.ne.s32.totalorder %s57, %s71
    %p73 = scmp.eq.s32.totalorder %s14, 0
    %p74 = por %p72, %p73
    %s75 = ssub.s32 %s15, %s27
    %s76 = ssub.s32 %s16, %s23
    %s77 = sor.u32 %s75, %s76
    %p78 = scmp.eq.s32.totalorder %s77, 0
    %s80 = sadd.s32 %s79, 1
    %s81 = scalar_select %p78, %s79, %s80
    %p84 = pneg %p78
    %p85 = scmp.eq.s32.totalorder %s8, 1
    %p86 = por %p84, %p85
    %p87 = scmp.ne.s32.totalorder %s79, %s82
    %p88 = scmp.eq.s32.totalorder %s8, 0
    %p89 = por %p87, %p88
    %p90 = scmp.ne.s32.totalorder %s79, %s82
    %p91 = scmp.eq.s32.totalorder %s13, 1
    %p92 = por %p90, %p91
    %p93 = scmp.ne.s32.totalorder %s82, %s83
    %p94 = scmp.eq.s32.totalorder %s13, 0
    %p95 = por %p93, %p94
    %p96 = scmp.ne.s32.totalorder %s82, %s83
    %p97 = scmp.eq.s32.totalorder %s14, 1
    %p98 = por %p96, %p97
    %p100 = scmp.ne.s32.totalorder %s83, %s99
    %p101 = scmp.eq.s32.totalorder %s14, 0
    %p102 = por %p100, %p101
    %p103 = scmp.le.s32.totalorder 1, %s8
    %p104 = scmp.lt.s32.totalorder %s8, 3
    %p105 = pnand %p103, %p104
    %p106 = pneg %p105
    // Predicated region
    $region9: #{tpu_custom_call.1} parent=5 // pred_check
      _
    $region10: #{tpu_custom_call.1} parent=5 // pred_check_branch
      %108 = sbr.rel (%p105) target = $region12
    $region11: #{tpu_custom_call.1} parent=5 // pred_region
      %s109 = ssub.s32 %s8, 1
      // Predicated region
      $region13: #{tpu_custom_call.1} parent=11 // pred_check
        %p110 = pneg %p67
      $region14: #{tpu_custom_call.1} parent=11 // pred_check_branch
        %112 = sbr.rel (%p110) target = $region16
      $region15: #{tpu_custom_call.1} parent=11 // pred_region
        _
      $region16: #{tpu_custom_call.1} parent=11 // pred_fallthru
        _
    $region12: #{tpu_custom_call.1} parent=5 // pred_fallthru
      _
    %p113 = scmp.lt.s32.totalorder %s8, 2
    // Predicated region
    $region17: #{tpu_custom_call.1} parent=5 // pred_check
      %p114 = pneg %p113
    $region18: #{tpu_custom_call.1} parent=5 // pred_check_branch
      %116 = sbr.rel (%p114) target = $region20
    $region19: #{tpu_custom_call.1} parent=5 // pred_region
      // Predicated region
      $region21: #{tpu_custom_call.1} parent=19 // pred_check
        %p117 = pneg %p40
      $region22: #{tpu_custom_call.1} parent=19 // pred_check_branch
        %119 = sbr.rel (%p117) target = $region24
      $region23: #{tpu_custom_call.1} parent=19 // pred_region
        %p120 = scmp.lt.s32.totalorder %s15, 1
        %s121 = scalar_select %p120, %s15, 1
        %s122 = smul.addr %s121, 54
        %s123 = smul.addr %s122, 8
        %s124 = scalar_lea.vmem %s0, %s123
      $region24: #{tpu_custom_call.1} parent=19 // pred_fallthru
        _
    $region20: #{tpu_custom_call.1} parent=5 // pred_fallthru
      _
    %p125 = scmp.le.s32.totalorder 1, %s8
    %p126 = scmp.lt.s32.totalorder %s8, 3
    %p127 = pnand %p125, %p126
    %p128 = pneg %p127
    // Predicated region
    $region25: #{tpu_custom_call.1} parent=5 // pred_check
      _
    $region26: #{tpu_custom_call.1} parent=5 // pred_check_branch
      %130 = sbr.rel (%p127) target = $region28
    $region27: #{tpu_custom_call.1} parent=5 // pred_region
      %s131 = ssub.s32 %s8, 1
      %p132 = scmp.lt.s32.totalorder %s17, 1
      %s133 = scalar_select %p132, %s17, 1
      %s134 = smul.addr %s133, 54
      %s135 = smul.addr %s134, 8
      %s136 = scalar_lea.vmem %s0, %s135
      %p137 = pneg %p46
      %p138 = pneg %p43
      %p139 = pneg %p67
      %p140 = pneg %p64
      %p141 = pneg %p95
      %p142 = pneg %p92
      %p143 = scmp.lt.s32.totalorder %s17, 1
      %s144 = scalar_select %p143, %s17, 1
      %p145 = scmp.lt.s32.totalorder %s18, 0
      %s146 = scalar_select %p145, %s18, 0
      %s147 = smul.addr %s144, 32
      %s148 = sadd.s32 %s146, %s147
      %s149 = smul.addr %s148, 8
      %s150 = scalar_lea.vmem %s2, %s149
      %p151 = scmp.lt.s32.totalorder %s17, 1
      %s152 = scalar_select %p151, %s17, 1
      %s153 = smul.addr %s152, 54
      %s154 = smul.addr %s153, 8
      %s155 = scalar_lea.vmem %s0, %s154
      %p156 = scmp.lt.s32.totalorder %s17, 1
      %s157 = scalar_select %p156, %s17, 1
      %p158 = scmp.lt.s32.totalorder %s18, 0
      %s159 = scalar_select %p158, %s18, 0
      %s160 = smul.addr %s157, 32
      %s161 = sadd.s32 %s159, %s160
      %s162 = smul.addr %s161, 8
      %s163 = scalar_lea.vmem %s2, %s162
      %p164 = scmp.eq.s32.totalorder %s18, 0
      // Predicated region
      $region29: #{tpu_custom_call.1} parent=27 // pred_check
        %p165 = pneg %p164
      $region30: #{tpu_custom_call.1} parent=27 // pred_check_branch
        %167 = sbr.rel (%p165) target = $region32
      $region31: #{tpu_custom_call.1} parent=27 // pred_region
        %v168 = vld [vmem:[%s155] sm:$0xff]
        %v169 = vld [vmem:[%s155 + $0x8] sm:$0xff]
        %v170 = vld [vmem:[%s155 + $0x18] sm:$0xff]
        %v171 = vld [vmem:[%s155 + $0x20] sm:$0xff]
        %v172 = vld [vmem:[%s155 + $0x30] sm:$0xff]
        %v173 = vld [vmem:[%s155 + $0x38] sm:$0xff]
        %v174 = vld [vmem:[%s155 + $0x48] sm:$0xff]
        %v175 = vld [vmem:[%s155 + $0x50] sm:$0xff]
        %v176 = vld [vmem:[%s155 + $0x60] sm:$0xff]
        %v177 = vld [vmem:[%s155 + $0x68] sm:$0xff]
        %v178 = vld [vmem:[%s155 + $0x78] sm:$0xff]
        %v179 = vld [vmem:[%s155 + $0x80] sm:$0xff]
        %v180 = vld [vmem:[%s155 + $0x90] sm:$0xff]
        %v181 = vld [vmem:[%s155 + $0x98] sm:$0xff]
        %v182 = vld [vmem:[%s155 + $0xa8] sm:$0xff]
        %v183 = vld [vmem:[%s155 + $0xb0] sm:$0xff]
        %v184 = vld [vmem:[%s155 + $0xc0] sm:$0xff]
        %v185 = vld [vmem:[%s155 + $0xc8] sm:$0xff]
        %v186 = vld [vmem:[%s155 + $0xd8] sm:$0xff]
        %v187 = vld [vmem:[%s155 + $0xe0] sm:$0xff]
        %v188 = vld [vmem:[%s155 + $0xf0] sm:$0xff]
        %v189 = vld [vmem:[%s155 + $0xf8] sm:$0xff]
        %v190 = vld [vmem:[%s155 + $0x108] sm:$0xff]
        %v191 = vld [vmem:[%s155 + $0x110] sm:$0xff]
        %v192 = vld [vmem:[%s155 + $0x120] sm:$0xff]
        %v193 = vld [vmem:[%s155 + $0x128] sm:$0xff]
        %v194 = vld [vmem:[%s155 + $0x138] sm:$0xff]
        %v195 = vld [vmem:[%s155 + $0x140] sm:$0xff]
        %v196 = vld [vmem:[%s155 + $0x150] sm:$0xff]
        %v197 = vld [vmem:[%s155 + $0x158] sm:$0xff]
        %v198 = vld [vmem:[%s155 + $0x168] sm:$0xff]
        %v199 = vld [vmem:[%s155 + $0x170] sm:$0xff]
        %vm200 = vcmask 31744
        %201 = vst.msk [vmem:[#allocation2] sm:$0xff] %vm200, %v168
        %202 = vst.msk [vmem:[#allocation2 + $0x8] sm:$0xff] %vm200, %v169
        %203 = vst.msk [vmem:[#allocation2 + $0x10] sm:$0xff] %vm200, %v170
        %204 = vst.msk [vmem:[#allocation2 + $0x18] sm:$0xff] %vm200, %v171
        %205 = vst.msk [vmem:[#allocation2 + $0x20] sm:$0xff] %vm200, %v172
        %206 = vst.msk [vmem:[#allocation2 + $0x28] sm:$0xff] %vm200, %v173
        %207 = vst.msk [vmem:[#allocation2 + $0x30] sm:$0xff] %vm200, %v174
        %208 = vst.msk [vmem:[#allocation2 + $0x38] sm:$0xff] %vm200, %v175
        %209 = vst.msk [vmem:[#allocation2 + $0x40] sm:$0xff] %vm200, %v176
        %210 = vst.msk [vmem:[#allocation2 + $0x48] sm:$0xff] %vm200, %v177
        %211 = vst.msk [vmem:[#allocation2 + $0x50] sm:$0xff] %vm200, %v178
        %212 = vst.msk [vmem:[#allocation2 + $0x58] sm:$0xff] %vm200, %v179
        %213 = vst.msk [vmem:[#allocation2 + $0x60] sm:$0xff] %vm200, %v180
        %214 = vst.msk [vmem:[#allocation2 + $0x68] sm:$0xff] %vm200, %v181
        %215 = vst.msk [vmem:[#allocation2 + $0x70] sm:$0xff] %vm200, %v182
        %216 = vst.msk [vmem:[#allocation2 + $0x78] sm:$0xff] %vm200, %v183
        %217 = vst.msk [vmem:[#allocation2 + $0x80] sm:$0xff] %vm200, %v184
        %218 = vst.msk [vmem:[#allocation2 + $0x88] sm:$0xff] %vm200, %v185
        %219 = vst.msk [vmem:[#allocation2 + $0x90] sm:$0xff] %vm200, %v186
        %220 = vst.msk [vmem:[#allocation2 + $0x98] sm:$0xff] %vm200, %v187
        %221 = vst.msk [vmem:[#allocation2 + $0xa0] sm:$0xff] %vm200, %v188
        %222 = vst.msk [vmem:[#allocation2 + $0xa8] sm:$0xff] %vm200, %v189
        %223 = vst.msk [vmem:[#allocation2 + $0xb0] sm:$0xff] %vm200, %v190
        %224 = vst.msk [vmem:[#allocation2 + $0xb8] sm:$0xff] %vm200, %v191
        %225 = vst.msk [vmem:[#allocation2 + $0xc0] sm:$0xff] %vm200, %v192
        %226 = vst.msk [vmem:[#allocation2 + $0xc8] sm:$0xff] %vm200, %v193
        %227 = vst.msk [vmem:[#allocation2 + $0xd0] sm:$0xff] %vm200, %v194
        %228 = vst.msk [vmem:[#allocation2 + $0xd8] sm:$0xff] %vm200, %v195
        %229 = vst.msk [vmem:[#allocation2 + $0xe0] sm:$0xff] %vm200, %v196
        %230 = vst.msk [vmem:[#allocation2 + $0xe8] sm:$0xff] %vm200, %v197
        %231 = vst.msk [vmem:[#allocation2 + $0xf0] sm:$0xff] %vm200, %v198
        %232 = vst.msk [vmem:[#allocation2 + $0xf8] sm:$0xff] %vm200, %v199
        %v233 = vld [vmem:[%s155 + $0x1] sm:$0xff]
        %v234 = vld [vmem:[%s155 + $0x9] sm:$0xff]
        %v235 = vld [vmem:[%s155 + $0x19] sm:$0xff]
        %v236 = vld [vmem:[%s155 + $0x21] sm:$0xff]
        %v237 = vld [vmem:[%s155 + $0x31] sm:$0xff]
        %v238 = vld [vmem:[%s155 + $0x39] sm:$0xff]
        %v239 = vld [vmem:[%s155 + $0x49] sm:$0xff]
        %v240 = vld [vmem:[%s155 + $0x51] sm:$0xff]
        %v241 = vld [vmem:[%s155 + $0x61] sm:$0xff]
        %v242 = vld [vmem:[%s155 + $0x69] sm:$0xff]
        %v243 = vld [vmem:[%s155 + $0x79] sm:$0xff]
        %v244 = vld [vmem:[%s155 + $0x81] sm:$0xff]
        %v245 = vld [vmem:[%s155 + $0x91] sm:$0xff]
        %v246 = vld [vmem:[%s155 + $0x99] sm:$0xff]
        %v247 = vld [vmem:[%s155 + $0xa9] sm:$0xff]
        %v248 = vld [vmem:[%s155 + $0xb1] sm:$0xff]
        %v249 = vld [vmem:[%s155 + $0xc1] sm:$0xff]
        %v250 = vld [vmem:[%s155 + $0xc9] sm:$0xff]
        %v251 = vld [vmem:[%s155 + $0xd9] sm:$0xff]
        %v252 = vld [vmem:[%s155 + $0xe1] sm:$0xff]
        %v253 = vld [vmem:[%s155 + $0xf1] sm:$0xff]
        %v254 = vld [vmem:[%s155 + $0xf9] sm:$0xff]
        %v255 = vld [vmem:[%s155 + $0x109] sm:$0xff]
        %v256 = vld [vmem:[%s155 + $0x111] sm:$0xff]
        %v257 = vld [vmem:[%s155 + $0x121] sm:$0xff]
        %v258 = vld [vmem:[%s155 + $0x129] sm:$0xff]
        %v259 = vld [vmem:[%s155 + $0x139] sm:$0xff]
        %v260 = vld [vmem:[%s155 + $0x141] sm:$0xff]
        %v261 = vld [vmem:[%s155 + $0x151] sm:$0xff]
        %v262 = vld [vmem:[%s155 + $0x159] sm:$0xff]
        %v263 = vld [vmem:[%s155 + $0x169] sm:$0xff]
        %v264 = vld [vmem:[%s155 + $0x171] sm:$0xff]
        %297 = vrot.lane.b32.xlu0 %v233, 4
        %v298 = vpop.permute.xlu0 %297
        %299 = vrot.lane.b32.xlu0 %v234, 4
        %v300 = vpop.permute.xlu0 %299
        %301 = vrot.lane.b32.xlu0 %v235, 4
        %v302 = vpop.permute.xlu0 %301
        %303 = vrot.lane.b32.xlu0 %v236, 4
        %v304 = vpop.permute.xlu0 %303
        %305 = vrot.lane.b32.xlu0 %v237, 4
        %v306 = vpop.permute.xlu0 %305
        %307 = vrot.lane.b32.xlu0 %v238, 4
        %v308 = vpop.permute.xlu0 %307
        %309 = vrot.lane.b32.xlu0 %v239, 4
        %v310 = vpop.permute.xlu0 %309
        %311 = vrot.lane.b32.xlu0 %v240, 4
        %v312 = vpop.permute.xlu0 %311
        %313 = vrot.lane.b32.xlu0 %v241, 4
        %v314 = vpop.permute.xlu0 %313
        %315 = vrot.lane.b32.xlu0 %v242, 4
        %v316 = vpop.permute.xlu0 %315
        %317 = vrot.lane.b32.xlu0 %v243, 4
        %v318 = vpop.permute.xlu0 %317
        %319 = vrot.lane.b32.xlu0 %v244, 4
        %v320 = vpop.permute.xlu0 %319
        %321 = vrot.lane.b32.xlu0 %v245, 4
        %v322 = vpop.permute.xlu0 %321
        %323 = vrot.lane.b32.xlu0 %v246, 4
        %v324 = vpop.permute.xlu0 %323
        %325 = vrot.lane.b32.xlu0 %v247, 4
        %v326 = vpop.permute.xlu0 %325
        %327 = vrot.lane.b32.xlu0 %v248, 4
        %v328 = vpop.permute.xlu0 %327
        %329 = vrot.lane.b32.xlu0 %v249, 4
        %v330 = vpop.permute.xlu0 %329
        %331 = vrot.lane.b32.xlu0 %v250, 4
        %v332 = vpop.permute.xlu0 %331
        %333 = vrot.lane.b32.xlu0 %v251, 4
        %v334 = vpop.permute.xlu0 %333
        %335 = vrot.lane.b32.xlu0 %v252, 4
        %v336 = vpop.permute.xlu0 %335
        %337 = vrot.lane.b32.xlu0 %v253, 4
        %v338 = vpop.permute.xlu0 %337
        %339 = vrot.lane.b32.xlu0 %v254, 4
        %v340 = vpop.permute.xlu0 %339
        %341 = vrot.lane.b32.xlu0 %v255, 4
        %v342 = vpop.permute.xlu0 %341
        %343 = vrot.lane.b32.xlu0 %v256, 4
        %v344 = vpop.permute.xlu0 %343
        %345 = vrot.lane.b32.xlu0 %v257, 4
        %v346 = vpop.permute.xlu0 %345
        %347 = vrot.lane.b32.xlu0 %v258, 4
        %v348 = vpop.permute.xlu0 %347
        %349 = vrot.lane.b32.xlu0 %v259, 4
        %v350 = vpop.permute.xlu0 %349
        %351 = vrot.lane.b32.xlu0 %v260, 4
        %v352 = vpop.permute.xlu0 %351
        %353 = vrot.lane.b32.xlu0 %v261, 4
        %v354 = vpop.permute.xlu0 %353
        %355 = vrot.lane.b32.xlu0 %v262, 4
        %v356 = vpop.permute.xlu0 %355
        %357 = vrot.lane.b32.xlu0 %v263, 4
        %v358 = vpop.permute.xlu0 %357
        %359 = vrot.lane.b32.xlu0 %v264, 4
        %v360 = vpop.permute.xlu0 %359
        %vm393 = vcmask 64544
        %394 = vst.msk [vmem:[#allocation2] sm:$0xff] %vm393, %v298
        %395 = vst.msk [vmem:[#allocation2 + $0x8] sm:$0xff] %vm393, %v300
        %396 = vst.msk [vmem:[#allocation2 + $0x10] sm:$0xff] %vm393, %v302
        %397 = vst.msk [vmem:[#allocation2 + $0x18] sm:$0xff] %vm393, %v304
        %398 = vst.msk [vmem:[#allocation2 + $0x20] sm:$0xff] %vm393, %v306
        %399 = vst.msk [vmem:[#allocation2 + $0x28] sm:$0xff] %vm393, %v308
        %400 = vst.msk [vmem:[#allocation2 + $0x30] sm:$0xff] %vm393, %v310
        %401 = vst.msk [vmem:[#allocation2 + $0x38] sm:$0xff] %vm393, %v312
        %402 = vst.msk [vmem:[#allocation2 + $0x40] sm:$0xff] %vm393, %v314
        %403 = vst.msk [vmem:[#allocation2 + $0x48] sm:$0xff] %vm393, %v316
        %404 = vst.msk [vmem:[#allocation2 + $0x50] sm:$0xff] %vm393, %v318
        %405 = vst.msk [vmem:[#allocation2 + $0x58] sm:$0xff] %vm393, %v320
        %406 = vst.msk [vmem:[#allocation2 + $0x60] sm:$0xff] %vm393, %v322
        %407 = vst.msk [vmem:[#allocation2 + $0x68] sm:$0xff] %vm393, %v324
        %408 = vst.msk [vmem:[#allocation2 + $0x70] sm:$0xff] %vm393, %v326
        %409 = vst.msk [vmem:[#allocation2 + $0x78] sm:$0xff] %vm393, %v328
        %410 = vst.msk [vmem:[#allocation2 + $0x80] sm:$0xff] %vm393, %v330
        %411 = vst.msk [vmem:[#allocation2 + $0x88] sm:$0xff] %vm393, %v332
        %412 = vst.msk [vmem:[#allocation2 + $0x90] sm:$0xff] %vm393, %v334
        %413 = vst.msk [vmem:[#allocation2 + $0x98] sm:$0xff] %vm393, %v336
        %414 = vst.msk [vmem:[#allocation2 + $0xa0] sm:$0xff] %vm393, %v338
        %415 = vst.msk [vmem:[#allocation2 + $0xa8] sm:$0xff] %vm393, %v340
        %416 = vst.msk [vmem:[#allocation2 + $0xb0] sm:$0xff] %vm393, %v342
        %417 = vst.msk [vmem:[#allocation2 + $0xb8] sm:$0xff] %vm393, %v344
        %418 = vst.msk [vmem:[#allocation2 + $0xc0] sm:$0xff] %vm393, %v346
        %419 = vst.msk [vmem:[#allocation2 + $0xc8] sm:$0xff] %vm393, %v348
        %420 = vst.msk [vmem:[#allocation2 + $0xd0] sm:$0xff] %vm393, %v350
        %421 = vst.msk [vmem:[#allocation2 + $0xd8] sm:$0xff] %vm393, %v352
        %422 = vst.msk [vmem:[#allocation2 + $0xe0] sm:$0xff] %vm393, %v354
        %423 = vst.msk [vmem:[#allocation2 + $0xe8] sm:$0xff] %vm393, %v356
        %424 = vst.msk [vmem:[#allocation2 + $0xf0] sm:$0xff] %vm393, %v358
        %425 = vst.msk [vmem:[#allocation2 + $0xf8] sm:$0xff] %vm393, %v360
        %v426 = vld [vmem:[%s155 + $0x2] sm:$0xff]
        %v427 = vld [vmem:[%s155 + $0xa] sm:$0xff]
        %v428 = vld [vmem:[%s155 + $0x1a] sm:$0xff]
        %v429 = vld [vmem:[%s155 + $0x22] sm:$0xff]
        %v430 = vld [vmem:[%s155 + $0x32] sm:$0xff]
        %v431 = vld [vmem:[%s155 + $0x3a] sm:$0xff]
        %v432 = vld [vmem:[%s155 + $0x4a] sm:$0xff]
        %v433 = vld [vmem:[%s155 + $0x52] sm:$0xff]
        %v434 = vld [vmem:[%s155 + $0x62] sm:$0xff]
        %v435 = vld [vmem:[%s155 + $0x6a] sm:$0xff]
        %v436 = vld [vmem:[%s155 + $0x7a] sm:$0xff]
        %v437 = vld [vmem:[%s155 + $0x82] sm:$0xff]
        %v438 = vld [vmem:[%s155 + $0x92] sm:$0xff]
        %v439 = vld [vmem:[%s155 + $0x9a] sm:$0xff]
        %v440 = vld [vmem:[%s155 + $0xaa] sm:$0xff]
        %v441 = vld [vmem:[%s155 + $0xb2] sm:$0xff]
        %v442 = vld [vmem:[%s155 + $0xc2] sm:$0xff]
        %v443 = vld [vmem:[%s155 + $0xca] sm:$0xff]
        %v444 = vld [vmem:[%s155 + $0xda] sm:$0xff]
        %v445 = vld [vmem:[%s155 + $0xe2] sm:$0xff]
        %v446 = vld [vmem:[%s155 + $0xf2] sm:$0xff]
        %v447 = vld [vmem:[%s155 + $0xfa] sm:$0xff]
        %v448 = vld [vmem:[%s155 + $0x10a] sm:$0xff]
        %v449 = vld [vmem:[%s155 + $0x112] sm:$0xff]
        %v450 = vld [vmem:[%s155 + $0x122] sm:$0xff]
        %v451 = vld [vmem:[%s155 + $0x12a] sm:$0xff]
        %v452 = vld [vmem:[%s155 + $0x13a] sm:$0xff]
        %v453 = vld [vmem:[%s155 + $0x142] sm:$0xff]
        %v454 = vld [vmem:[%s155 + $0x152] sm:$0xff]
        %v455 = vld [vmem:[%s155 + $0x15a] sm:$0xff]
        %v456 = vld [vmem:[%s155 + $0x16a] sm:$0xff]
        %v457 = vld [vmem:[%s155 + $0x172] sm:$0xff]
        %490 = vrot.lane.b32.xlu0 %v426, 8
        %v491 = vpop.permute.xlu0 %490
        %492 = vrot.lane.b32.xlu0 %v427, 8
        %v493 = vpop.permute.xlu0 %492
        %494 = vrot.lane.b32.xlu0 %v428, 8
        %v495 = vpop.permute.xlu0 %494
        %496 = vrot.lane.b32.xlu0 %v429, 8
        %v497 = vpop.permute.xlu0 %496
        %498 = vrot.lane.b32.xlu0 %v430, 8
        %v499 = vpop.permute.xlu0 %498
        %500 = vrot.lane.b32.xlu0 %v431, 8
        %v501 = vpop.permute.xlu0 %500
        %502 = vrot.lane.b32.xlu0 %v432, 8
        %v503 = vpop.permute.xlu0 %502
        %504 = vrot.lane.b32.xlu0 %v433, 8
        %v505 = vpop.permute.xlu0 %504
        %506 = vrot.lane.b32.xlu0 %v434, 8
        %v507 = vpop.permute.xlu0 %506
        %508 = vrot.lane.b32.xlu0 %v435, 8
        %v509 = vpop.permute.xlu0 %508
        %510 = vrot.lane.b32.xlu0 %v436, 8
        %v511 = vpop.permute.xlu0 %510
        %512 = vrot.lane.b32.xlu0 %v437, 8
        %v513 = vpop.permute.xlu0 %512
        %514 = vrot.lane.b32.xlu0 %v438, 8
        %v515 = vpop.permute.xlu0 %514
        %516 = vrot.lane.b32.xlu0 %v439, 8
        %v517 = vpop.permute.xlu0 %516
        %518 = vrot.lane.b32.xlu0 %v440, 8
        %v519 = vpop.permute.xlu0 %518
        %520 = vrot.lane.b32.xlu0 %v441, 8
        %v521 = vpop.permute.xlu0 %520
        %522 = vrot.lane.b32.xlu0 %v442, 8
        %v523 = vpop.permute.xlu0 %522
        %524 = vrot.lane.b32.xlu0 %v443, 8
        %v525 = vpop.permute.xlu0 %524
        %526 = vrot.lane.b32.xlu0 %v444, 8
        %v527 = vpop.permute.xlu0 %526
        %528 = vrot.lane.b32.xlu0 %v445, 8
        %v529 = vpop.permute.xlu0 %528
        %530 = vrot.lane.b32.xlu0 %v446, 8
        %v531 = vpop.permute.xlu0 %530
        %532 = vrot.lane.b32.xlu0 %v447, 8
        %v533 = vpop.permute.xlu0 %532
        %534 = vrot.lane.b32.xlu0 %v448, 8
        %v535 = vpop.permute.xlu0 %534
        %536 = vrot.lane.b32.xlu0 %v449, 8
        %v537 = vpop.permute.xlu0 %536
        %538 = vrot.lane.b32.xlu0 %v450, 8
        %v539 = vpop.permute.xlu0 %538
        %540 = vrot.lane.b32.xlu0 %v451, 8
        %v541 = vpop.permute.xlu0 %540
        %542 = vrot.lane.b32.xlu0 %v452, 8
        %v543 = vpop.permute.xlu0 %542
        %544 = vrot.lane.b32.xlu0 %v453, 8
        %v545 = vpop.permute.xlu0 %544
        %546 = vrot.lane.b32.xlu0 %v454, 8
        %v547 = vpop.permute.xlu0 %546
        %548 = vrot.lane.b32.xlu0 %v455, 8
        %v549 = vpop.permute.xlu0 %548
        %550 = vrot.lane.b32.xlu0 %v456, 8
        %v551 = vpop.permute.xlu0 %550
        %552 = vrot.lane.b32.xlu0 %v457, 8
        %v553 = vpop.permute.xlu0 %552
        %vm586 = vcmask 97344
        %587 = vst.msk [vmem:[#allocation2] sm:$0xff] %vm586, %v491
        %588 = vst.msk [vmem:[#allocation2 + $0x8] sm:$0xff] %vm586, %v493
        %589 = vst.msk [vmem:[#allocation2 + $0x10] sm:$0xff] %vm586, %v495
        %590 = vst.msk [vmem:[#allocation2 + $0x18] sm:$0xff] %vm586, %v497
        %591 = vst.msk [vmem:[#allocation2 + $0x20] sm:$0xff] %vm586, %v499
        %592 = vst.msk [vmem:[#allocation2 + $0x28] sm:$0xff] %vm586, %v501
        %593 = vst.msk [vmem:[#allocation2 + $0x30] sm:$0xff] %vm586, %v503
        %594 = vst.msk [vmem:[#allocation2 + $0x38] sm:$0xff] %vm586, %v505
        %595 = vst.msk [vmem:[#allocation2 + $0x40] sm:$0xff] %vm586, %v507
        %596 = vst.msk [vmem:[#allocation2 + $0x48] sm:$0xff] %vm586, %v509
        %597 = vst.msk [vmem:[#allocation2 + $0x50] sm:$0xff] %vm586, %v511
        %598 = vst.msk [vmem:[#allocation2 + $0x58] sm:$0xff] %vm586, %v513
        %599 = vst.msk [vmem:[#allocation2 + $0x60] sm:$0xff] %vm586, %v515
        %600 = vst.msk [vmem:[#allocation2 + $0x68] sm:$0xff] %vm586, %v517
        %601 = vst.msk [vmem:[#allocation2 + $0x70] sm:$0xff] %vm586, %v519
        %602 = vst.msk [vmem:[#allocation2 + $0x78] sm:$0xff] %vm586, %v521
        %603 = vst.msk [vmem:[#allocation2 + $0x80] sm:$0xff] %vm586, %v523
        %604 = vst.msk [vmem:[#allocation2 + $0x88] sm:$0xff] %vm586, %v525
        %605 = vst.msk [vmem:[#allocation2 + $0x90] sm:$0xff] %vm586, %v527
        %606 = vst.msk [vmem:[#allocation2 + $0x98] sm:$0xff] %vm586, %v529
        %607 = vst.msk [vmem:[#allocation2 + $0xa0] sm:$0xff] %vm586, %v531
        %608 = vst.msk [vmem:[#allocation2 + $0xa8] sm:$0xff] %vm586, %v533
        %609 = vst.msk [vmem:[#allocation2 + $0xb0] sm:$0xff] %vm586, %v535
        %610 = vst.msk [vmem:[#allocation2 + $0xb8] sm:$0xff] %vm586, %v537
        %611 = vst.msk [vmem:[#allocation2 + $0xc0] sm:$0xff] %vm586, %v539
        %612 = vst.msk [vmem:[#allocation2 + $0xc8] sm:$0xff] %vm586, %v541
        %613 = vst.msk [vmem:[#allocation2 + $0xd0] sm:$0xff] %vm586, %v543
        %614 = vst.msk [vmem:[#allocation2 + $0xd8] sm:$0xff] %vm586, %v545
        %615 = vst.msk [vmem:[#allocation2 + $0xe0] sm:$0xff] %vm586, %v547
        %616 = vst.msk [vmem:[#allocation2 + $0xe8] sm:$0xff] %vm586, %v549
        %617 = vst.msk [vmem:[#allocation2 + $0xf0] sm:$0xff] %vm586, %v551
        %618 = vst.msk [vmem:[#allocation2 + $0xf8] sm:$0xff] %vm586, %v553
        %s619 = scalar_lea.vmem %s155, 24
        %v620 = vld [vmem:[%s619] sm:$0xff]
        %v621 = vld [vmem:[%s619 + $0x8] sm:$0xff]
        %v622 = vld [vmem:[%s619 + $0x18] sm:$0xff]
        %v623 = vld [vmem:[%s619 + $0x20] sm:$0xff]
        %v624 = vld [vmem:[%s619 + $0x30] sm:$0xff]
        %v625 = vld [vmem:[%s619 + $0x38] sm:$0xff]
        %v626 = vld [vmem:[%s619 + $0x48] sm:$0xff]
        %v627 = vld [vmem:[%s619 + $0x50] sm:$0xff]
        %v628 = vld [vmem:[%s619 + $0x60] sm:$0xff]
        %v629 = vld [vmem:[%s619 + $0x68] sm:$0xff]
        %v630 = vld [vmem:[%s619 + $0x78] sm:$0xff]
        %v631 = vld [vmem:[%s619 + $0x80] sm:$0xff]
        %v632 = vld [vmem:[%s619 + $0x90] sm:$0xff]
        %v633 = vld [vmem:[%s619 + $0x98] sm:$0xff]
        %v634 = vld [vmem:[%s619 + $0xa8] sm:$0xff]
        %v635 = vld [vmem:[%s619 + $0xb0] sm:$0xff]
        %v636 = vld [vmem:[%s619 + $0xc0] sm:$0xff]
        %v637 = vld [vmem:[%s619 + $0xc8] sm:$0xff]
        %v638 = vld [vmem:[%s619 + $0xd8] sm:$0xff]
        %v639 = vld [vmem:[%s619 + $0xe0] sm:$0xff]
        %v640 = vld [vmem:[%s619 + $0xf0] sm:$0xff]
        %v641 = vld [vmem:[%s619 + $0xf8] sm:$0xff]
        %v642 = vld [vmem:[%s619 + $0x108] sm:$0xff]
        %v643 = vld [vmem:[%s619 + $0x110] sm:$0xff]
        %v644 = vld [vmem:[%s619 + $0x120] sm:$0xff]
        %v645 = vld [vmem:[%s619 + $0x128] sm:$0xff]
        %v646 = vld [vmem:[%s619 + $0x138] sm:$0xff]
        %v647 = vld [vmem:[%s619 + $0x140] sm:$0xff]
        %v648 = vld [vmem:[%s619 + $0x150] sm:$0xff]
        %v649 = vld [vmem:[%s619 + $0x158] sm:$0xff]
        %v650 = vld [vmem:[%s619 + $0x168] sm:$0xff]
        %v651 = vld [vmem:[%s619 + $0x170] sm:$0xff]
        %684 = vrot.lane.b32.xlu0 %v620, 12
        %v685 = vpop.permute.xlu0 %684
        %686 = vrot.lane.b32.xlu0 %v621, 12
        %v687 = vpop.permute.xlu0 %686
        %688 = vrot.lane.b32.xlu0 %v622, 12
        %v689 = vpop.permute.xlu0 %688
        %690 = vrot.lane.b32.xlu0 %v623, 12
        %v691 = vpop.permute.xlu0 %690
        %692 = vrot.lane.b32.xlu0 %v624, 12
        %v693 = vpop.permute.xlu0 %692
        %694 = vrot.lane.b32.xlu0 %v625, 12
        %v695 = vpop.permute.xlu0 %694
        %696 = vrot.lane.b32.xlu0 %v626, 12
        %v697 = vpop.permute.xlu0 %696
        %698 = vrot.lane.b32.xlu0 %v627, 12
        %v699 = vpop.permute.xlu0 %698
        %700 = vrot.lane.b32.xlu0 %v628, 12
        %v701 = vpop.permute.xlu0 %700
        %702 = vrot.lane.b32.xlu0 %v629, 12
        %v703 = vpop.permute.xlu0 %702
        %704 = vrot.lane.b32.xlu0 %v630, 12
        %v705 = vpop.permute.xlu0 %704
        %706 = vrot.lane.b32.xlu0 %v631, 12
        %v707 = vpop.permute.xlu0 %706
        %708 = vrot.lane.b32.xlu0 %v632, 12
        %v709 = vpop.permute.xlu0 %708
        %710 = vrot.lane.b32.xlu0 %v633, 12
        %v711 = vpop.permute.xlu0 %710
        %712 = vrot.lane.b32.xlu0 %v634, 12
        %v713 = vpop.permute.xlu0 %712
        %714 = vrot.lane.b32.xlu0 %v635, 12
        %v715 = vpop.permute.xlu0 %714
        %716 = vrot.lane.b32.xlu0 %v636, 12
        %v717 = vpop.permute.xlu0 %716
        %718 = vrot.lane.b32.xlu0 %v637, 12
        %v719 = vpop.permute.xlu0 %718
        %720 = vrot.lane.b32.xlu0 %v638, 12
        %v721 = vpop.permute.xlu0 %720
        %722 = vrot.lane.b32.xlu0 %v639, 12
        %v723 = vpop.permute.xlu0 %722
        %724 = vrot.lane.b32.xlu0 %v640, 12
        %v725 = vpop.permute.xlu0 %724
        %726 = vrot.lane.b32.xlu0 %v641, 12
        %v727 = vpop.permute.xlu0 %726
        %728 = vrot.lane.b32.xlu0 %v642, 12
        %v729 = vpop.permute.xlu0 %728
        %730 = vrot.lane.b32.xlu0 %v643, 12
        %v731 = vpop.permute.xlu0 %730
        %732 = vrot.lane.b32.xlu0 %v644, 12
        %v733 = vpop.permute.xlu0 %732
        %734 = vrot.lane.b32.xlu0 %v645, 12
        %v735 = vpop.permute.xlu0 %734
        %736 = vrot.lane.b32.xlu0 %v646, 12
        %v737 = vpop.permute.xlu0 %736
        %738 = vrot.lane.b32.xlu0 %v647, 12
        %v739 = vpop.permute.xlu0 %738
        %740 = vrot.lane.b32.xlu0 %v648, 12
        %v741 = vpop.permute.xlu0 %740
        %742 = vrot.lane.b32.xlu0 %v649, 12
        %v743 = vpop.permute.xlu0 %742
        %744 = vrot.lane.b32.xlu0 %v650, 12
        %v745 = vpop.permute.xlu0 %744
        %746 = vrot.lane.b32.xlu0 %v651, 12
        %v747 = vpop.permute.xlu0 %746
        %vm780 = vcmask 130144
        %781 = vst.msk [vmem:[#allocation2] sm:$0xff] %vm780, %v685
        %782 = vst.msk [vmem:[#allocation2 + $0x8] sm:$0xff] %vm780, %v687
        %783 = vst.msk [vmem:[#allocation2 + $0x10] sm:$0xff] %vm780, %v689
        %784 = vst.msk [vmem:[#allocation2 + $0x18] sm:$0xff] %vm780, %v691
        %785 = vst.msk [vmem:[#allocation2 + $0x20] sm:$0xff] %vm780, %v693
        %786 = vst.msk [vmem:[#allocation2 + $0x28] sm:$0xff] %vm780, %v695
        %787 = vst.msk [vmem:[#allocation2 + $0x30] sm:$0xff] %vm780, %v697
        %788 = vst.msk [vmem:[#allocation2 + $0x38] sm:$0xff] %vm780, %v699
        %789 = vst.msk [vmem:[#allocation2 + $0x40] sm:$0xff] %vm780, %v701
        %790 = vst.msk [vmem:[#allocation2 + $0x48] sm:$0xff] %vm780, %v703
        %791 = vst.msk [vmem:[#allocation2 + $0x50] sm:$0xff] %vm780, %v705
        %792 = vst.msk [vmem:[#allocation2 + $0x58] sm:$0xff] %vm780, %v707
        %793 = vst.msk [vmem:[#allocation2 + $0x60] sm:$0xff] %vm780, %v709
        %794 = vst.msk [vmem:[#allocation2 + $0x68] sm:$0xff] %vm780, %v711
        %795 = vst.msk [vmem:[#allocation2 + $0x70] sm:$0xff] %vm780, %v713
        %796 = vst.msk [vmem:[#allocation2 + $0x78] sm:$0xff] %vm780, %v715
        %797 = vst.msk [vmem:[#allocation2 + $0x80] sm:$0xff] %vm780, %v717
        %798 = vst.msk [vmem:[#allocation2 + $0x88] sm:$0xff] %vm780, %v719
        %799 = vst.msk [vmem:[#allocation2 + $0x90] sm:$0xff] %vm780, %v721
        %800 = vst.msk [vmem:[#allocation2 + $0x98] sm:$0xff] %vm780, %v723
        %801 = vst.msk [vmem:[#allocation2 + $0xa0] sm:$0xff] %vm780, %v725
        %802 = vst.msk [vmem:[#allocation2 + $0xa8] sm:$0xff] %vm780, %v727
        %803 = vst.msk [vmem:[#allocation2 + $0xb0] sm:$0xff] %vm780, %v729
        %804 = vst.msk [vmem:[#allocation2 + $0xb8] sm:$0xff] %vm780, %v731
        %805 = vst.msk [vmem:[#allocation2 + $0xc0] sm:$0xff] %vm780, %v733
        %806 = vst.msk [vmem:[#allocation2 + $0xc8] sm:$0xff] %vm780, %v735
        %807 = vst.msk [vmem:[#allocation2 + $0xd0] sm:$0xff] %vm780, %v737
        %808 = vst.msk [vmem:[#allocation2 + $0xd8] sm:$0xff] %vm780, %v739
        %809 = vst.msk [vmem:[#allocation2 + $0xe0] sm:$0xff] %vm780, %v741
        %810 = vst.msk [vmem:[#allocation2 + $0xe8] sm:$0xff] %vm780, %v743
        %811 = vst.msk [vmem:[#allocation2 + $0xf0] sm:$0xff] %vm780, %v745
        %812 = vst.msk [vmem:[#allocation2 + $0xf8] sm:$0xff] %vm780, %v747
        %v813 = vld [vmem:[%s619 + $0x1] sm:$0xff]
        %v814 = vld [vmem:[%s619 + $0x9] sm:$0xff]
        %v815 = vld [vmem:[%s619 + $0x19] sm:$0xff]
        %v816 = vld [vmem:[%s619 + $0x21] sm:$0xff]
        %v817 = vld [vmem:[%s619 + $0x31] sm:$0xff]
        %v818 = vld [vmem:[%s619 + $0x39] sm:$0xff]
        %v819 = vld [vmem:[%s619 + $0x49] sm:$0xff]
        %v820 = vld [vmem:[%s619 + $0x51] sm:$0xff]
        %v821 = vld [vmem:[%s619 + $0x61] sm:$0xff]
        %v822 = vld [vmem:[%s619 + $0x69] sm:$0xff]
        %v823 = vld [vmem:[%s619 + $0x79] sm:$0xff]
        %v824 = vld [vmem:[%s619 + $0x81] sm:$0xff]
        %v825 = vld [vmem:[%s619 + $0x91] sm:$0xff]
        %v826 = vld [vmem:[%s619 + $0x99] sm:$0xff]
        %v827 = vld [vmem:[%s619 + $0xa9] sm:$0xff]
        %v828 = vld [vmem:[%s619 + $0xb1] sm:$0xff]
        %v829 = vld [vmem:[%s619 + $0xc1] sm:$0xff]
        %v830 = vld [vmem:[%s619 + $0xc9] sm:$0xff]
        %v831 = vld [vmem:[%s619 + $0xd9] sm:$0xff]
        %v832 = vld [vmem:[%s619 + $0xe1] sm:$0xff]
        %v833 = vld [vmem:[%s619 + $0xf1] sm:$0xff]
        %v834 = vld [vmem:[%s619 + $0xf9] sm:$0xff]
        %v835 = vld [vmem:[%s619 + $0x109] sm:$0xff]
        %v836 = vld [vmem:[%s619 + $0x111] sm:$0xff]
        %v837 = vld [vmem:[%s619 + $0x121] sm:$0xff]
        %v838 = vld [vmem:[%s619 + $0x129] sm:$0xff]
        %v839 = vld [vmem:[%s619 + $0x139] sm:$0xff]
        %v840 = vld [vmem:[%s619 + $0x141] sm:$0xff]
        %v841 = vld [vmem:[%s619 + $0x151] sm:$0xff]
        %v842 = vld [vmem:[%s619 + $0x159] sm:$0xff]
        %v843 = vld [vmem:[%s619 + $0x169] sm:$0xff]
        %v844 = vld [vmem:[%s619 + $0x171] sm:$0xff]
        %877 = vrot.lane.b32.xlu0 %v813, 16
        %v878 = vpop.permute.xlu0 %877
        %879 = vrot.lane.b32.xlu0 %v814, 16
        %v880 = vpop.permute.xlu0 %879
        %881 = vrot.lane.b32.xlu0 %v815, 16
        %v882 = vpop.permute.xlu0 %881
        %883 = vrot.lane.b32.xlu0 %v816, 16
        %v884 = vpop.permute.xlu0 %883
        %885 = vrot.lane.b32.xlu0 %v817, 16
        %v886 = vpop.permute.xlu0 %885
        %887 = vrot.lane.b32.xlu0 %v818, 16
        %v888 = vpop.permute.xlu0 %887
        %889 = vrot.lane.b32.xlu0 %v819, 16
        %v890 = vpop.permute.xlu0 %889
        %891 = vrot.lane.b32.xlu0 %v820, 16
        %v892 = vpop.permute.xlu0 %891
        %893 = vrot.lane.b32.xlu0 %v821, 16
        %v894 = vpop.permute.xlu0 %893
        %895 = vrot.lane.b32.xlu0 %v822, 16
        %v896 = vpop.permute.xlu0 %895
        %897 = vrot.lane.b32.xlu0 %v823, 16
        %v898 = vpop.permute.xlu0 %897
        %899 = vrot.lane.b32.xlu0 %v824, 16
        %v900 = vpop.permute.xlu0 %899
        %901 = vrot.lane.b32.xlu0 %v825, 16
        %v902 = vpop.permute.xlu0 %901
        %903 = vrot.lane.b32.xlu0 %v826, 16
        %v904 = vpop.permute.xlu0 %903
        %905 = vrot.lane.b32.xlu0 %v827, 16
        %v906 = vpop.permute.xlu0 %905
        %907 = vrot.lane.b32.xlu0 %v828, 16
        %v908 = vpop.permute.xlu0 %907
        %909 = vrot.lane.b32.xlu0 %v829, 16
        %v910 = vpop.permute.xlu0 %909
        %911 = vrot.lane.b32.xlu0 %v830, 16
        %v912 = vpop.permute.xlu0 %911
        %913 = vrot.lane.b32.xlu0 %v831, 16
        %v914 = vpop.permute.xlu0 %913
        %915 = vrot.lane.b32.xlu0 %v832, 16
        %v916 = vpop.permute.xlu0 %915
        %917 = vrot.lane.b32.xlu0 %v833, 16
        %v918 = vpop.permute.xlu0 %917
        %919 = vrot.lane.b32.xlu0 %v834, 16
        %v920 = vpop.permute.xlu0 %919
        %921 = vrot.lane.b32.xlu0 %v835, 16
        %v922 = vpop.permute.xlu0 %921
        %923 = vrot.lane.b32.xlu0 %v836, 16
        %v924 = vpop.permute.xlu0 %923
        %925 = vrot.lane.b32.xlu0 %v837, 16
        %v926 = vpop.permute.xlu0 %925
        %927 = vrot.lane.b32.xlu0 %v838, 16
        %v928 = vpop.permute.xlu0 %927
        %929 = vrot.lane.b32.xlu0 %v839, 16
        %v930 = vpop.permute.xlu0 %929
        %931 = vrot.lane.b32.xlu0 %v840, 16
        %v932 = vpop.permute.xlu0 %931
        %933 = vrot.lane.b32.xlu0 %v841, 16
        %v934 = vpop.permute.xlu0 %933
        %935 = vrot.lane.b32.xlu0 %v842, 16
        %v936 = vpop.permute.xlu0 %935
        %937 = vrot.lane.b32.xlu0 %v843, 16
        %v938 = vpop.permute.xlu0 %937
        %939 = vrot.lane.b32.xlu0 %v844, 16
        %v940 = vpop.permute.xlu0 %939
        %vm973 = vcmask 162944
        %974 = vst.msk [vmem:[#allocation2] sm:$0xff] %vm973, %v878
        %975 = vst.msk [vmem:[#allocation2 + $0x8] sm:$0xff] %vm973, %v880
        %976 = vst.msk [vmem:[#allocation2 + $0x10] sm:$0xff] %vm973, %v882
        %977 = vst.msk [vmem:[#allocation2 + $0x18] sm:$0xff] %vm973, %v884
        %978 = vst.msk [vmem:[#allocation2 + $0x20] sm:$0xff] %vm973, %v886
        %979 = vst.msk [vmem:[#allocation2 + $0x28] sm:$0xff] %vm973, %v888
        %980 = vst.msk [vmem:[#allocation2 + $0x30] sm:$0xff] %vm973, %v890
        %981 = vst.msk [vmem:[#allocation2 + $0x38] sm:$0xff] %vm973, %v892
        %982 = vst.msk [vmem:[#allocation2 + $0x40] sm:$0xff] %vm973, %v894
        %983 = vst.msk [vmem:[#allocation2 + $0x48] sm:$0xff] %vm973, %v896
        %984 = vst.msk [vmem:[#allocation2 + $0x50] sm:$0xff] %vm973, %v898
        %985 = vst.msk [vmem:[#allocation2 + $0x58] sm:$0xff] %vm973, %v900
        %986 = vst.msk [vmem:[#allocation2 + $0x60] sm:$0xff] %vm973, %v902
        %987 = vst.msk [vmem:[#allocation2 + $0x68] sm:$0xff] %vm973, %v904
        %988 = vst.msk [vmem:[#allocation2 + $0x70] sm:$0xff] %vm973, %v906
        %989 = vst.msk [vmem:[#allocation2 + $0x78] sm:$0xff] %vm973, %v908
        %990 = vst.msk [vmem:[#allocation2 + $0x80] sm:$0xff] %vm973, %v910
        %991 = vst.msk [vmem:[#allocation2 + $0x88] sm:$0xff] %vm973, %v912
        %992 = vst.msk [vmem:[#allocation2 + $0x90] sm:$0xff] %vm973, %v914
        %993 = vst.msk [vmem:[#allocation2 + $0x98] sm:$0xff] %vm973, %v916
        %994 = vst.msk [vmem:[#allocation2 + $0xa0] sm:$0xff] %vm973, %v918
        %995 = vst.msk [vmem:[#allocation2 + $0xa8] sm:$0xff] %vm973, %v920
        %996 = vst.msk [vmem:[#allocation2 + $0xb0] sm:$0xff] %vm973, %v922
        %997 = vst.msk [vmem:[#allocation2 + $0xb8] sm:$0xff] %vm973, %v924
        %998 = vst.msk [vmem:[#allocation2 + $0xc0] sm:$0xff] %vm973, %v926
        %999 = vst.msk [vmem:[#allocation2 + $0xc8] sm:$0xff] %vm973, %v928
        %1000 = vst.msk [vmem:[#allocation2 + $0xd0] sm:$0xff] %vm973, %v930
        %1001 = vst.msk [vmem:[#allocation2 + $0xd8] sm:$0xff] %vm973, %v932
        %1002 = vst.msk [vmem:[#allocation2 + $0xe0] sm:$0xff] %vm973, %v934
        %1003 = vst.msk [vmem:[#allocation2 + $0xe8] sm:$0xff] %vm973, %v936
        %1004 = vst.msk [vmem:[#allocation2 + $0xf0] sm:$0xff] %vm973, %v938
        %1005 = vst.msk [vmem:[#allocation2 + $0xf8] sm:$0xff] %vm973, %v940
        %v1006 = vld [vmem:[%s619 + $0x2] sm:$0xff]
        %v1007 = vld [vmem:[%s619 + $0xa] sm:$0xff]
        %v1008 = vld [vmem:[%s619 + $0x1a] sm:$0xff]
        %v1009 = vld [vmem:[%s619 + $0x22] sm:$0xff]
        %v1010 = vld [vmem:[%s619 + $0x32] sm:$0xff]
        %v1011 = vld [vmem:[%s619 + $0x3a] sm:$0xff]
        %v1012 = vld [vmem:[%s619 + $0x4a] sm:$0xff]
        %v1013 = vld [vmem:[%s619 + $0x52] sm:$0xff]
        %v1014 = vld [vmem:[%s619 + $0x62] sm:$0xff]
        %v1015 = vld [vmem:[%s619 + $0x6a] sm:$0xff]
        %v1016 = vld [vmem:[%s619 + $0x7a] sm:$0xff]
        %v1017 = vld [vmem:[%s619 + $0x82] sm:$0xff]
        %v1018 = vld [vmem:[%s619 + $0x92] sm:$0xff]
        %v1019 = vld [vmem:[%s619 + $0x9a] sm:$0xff]
        %v1020 = vld [vmem:[%s619 + $0xaa] sm:$0xff]
        %v1021 = vld [vmem:[%s619 + $0xb2] sm:$0xff]
        %v1022 = vld [vmem:[%s619 + $0xc2] sm:$0xff]
        %v1023 = vld [vmem:[%s619 + $0xca] sm:$0xff]
        %v1024 = vld [vmem:[%s619 + $0xda] sm:$0xff]
        %v1025 = vld [vmem:[%s619 + $0xe2] sm:$0xff]
        %v1026 = vld [vmem:[%s619 + $0xf2] sm:$0xff]
        %v1027 = vld [vmem:[%s619 + $0xfa] sm:$0xff]
        %v1028 = vld [vmem:[%s619 + $0x10a] sm:$0xff]
        %v1029 = vld [vmem:[%s619 + $0x112] sm:$0xff]
        %v1030 = vld [vmem:[%s619 + $0x122] sm:$0xff]
        %v1031 = vld [vmem:[%s619 + $0x12a] sm:$0xff]
        %v1032 = vld [vmem:[%s619 + $0x13a] sm:$0xff]
        %v1033 = vld [vmem:[%s619 + $0x142] sm:$0xff]
        %v1034 = vld [vmem:[%s619 + $0x152] sm:$0xff]
        %v1035 = vld [vmem:[%s619 + $0x15a] sm:$0xff]
        %v1036 = vld [vmem:[%s619 + $0x16a] sm:$0xff]
        %v1037 = vld [vmem:[%s619 + $0x172] sm:$0xff]
        %1070 = vrot.lane.b32.xlu0 %v1006, 20
        %v1071 = vpop.permute.xlu0 %1070
        %1072 = vrot.lane.b32.xlu0 %v1007, 20
        %v1073 = vpop.permute.xlu0 %1072
        %1074 = vrot.lane.b32.xlu0 %v1008, 20
        %v1075 = vpop.permute.xlu0 %1074
        %1076 = vrot.lane.b32.xlu0 %v1009, 20
        %v1077 = vpop.permute.xlu0 %1076
        %1078 = vrot.lane.b32.xlu0 %v1010, 20
        %v1079 = vpop.permute.xlu0 %1078
        %1080 = vrot.lane.b32.xlu0 %v1011, 20
        %v1081 = vpop.permute.xlu0 %1080
        %1082 = vrot.lane.b32.xlu0 %v1012, 20
        %v1083 = vpop.permute.xlu0 %1082
        %1084 = vrot.lane.b32.xlu0 %v1013, 20
        %v1085 = vpop.permute.xlu0 %1084
        %1086 = vrot.lane.b32.xlu0 %v1014, 20
        %v1087 = vpop.permute.xlu0 %1086
        %1088 = vrot.lane.b32.xlu0 %v1015, 20
        %v1089 = vpop.permute.xlu0 %1088
        %1090 = vrot.lane.b32.xlu0 %v1016, 20
        %v1091 = vpop.permute.xlu0 %1090
        %1092 = vrot.lane.b32.xlu0 %v1017, 20
        %v1093 = vpop.permute.xlu0 %1092
        %1094 = vrot.lane.b32.xlu0 %v1018, 20
        %v1095 = vpop.permute.xlu0 %1094
        %1096 = vrot.lane.b32.xlu0 %v1019, 20
        %v1097 = vpop.permute.xlu0 %1096
        %1098 = vrot.lane.b32.xlu0 %v1020, 20
        %v1099 = vpop.permute.xlu0 %1098
        %1100 = vrot.lane.b32.xlu0 %v1021, 20
        %v1101 = vpop.permute.xlu0 %1100
        %1102 = vrot.lane.b32.xlu0 %v1022, 20
        %v1103 = vpop.permute.xlu0 %1102
        %1104 = vrot.lane.b32.xlu0 %v1023, 20
        %v1105 = vpop.permute.xlu0 %1104
        %1106 = vrot.lane.b32.xlu0 %v1024, 20
        %v1107 = vpop.permute.xlu0 %1106
        %1108 = vrot.lane.b32.xlu0 %v1025, 20
        %v1109 = vpop.permute.xlu0 %1108
        %1110 = vrot.lane.b32.xlu0 %v1026, 20
        %v1111 = vpop.permute.xlu0 %1110
        %1112 = vrot.lane.b32.xlu0 %v1027, 20
        %v1113 = vpop.permute.xlu0 %1112
        %1114 = vrot.lane.b32.xlu0 %v1028, 20
        %v1115 = vpop.permute.xlu0 %1114
        %1116 = vrot.lane.b32.xlu0 %v1029, 20
        %v1117 = vpop.permute.xlu0 %1116
        %1118 = vrot.lane.b32.xlu0 %v1030, 20
        %v1119 = vpop.permute.xlu0 %1118
        %1120 = vrot.lane.b32.xlu0 %v1031, 20
        %v1121 = vpop.permute.xlu0 %1120
        %1122 = vrot.lane.b32.xlu0 %v1032, 20
        %v1123 = vpop.permute.xlu0 %1122
        %1124 = vrot.lane.b32.xlu0 %v1033, 20
        %v1125 = vpop.permute.xlu0 %1124
        %1126 = vrot.lane.b32.xlu0 %v1034, 20
        %v1127 = vpop.permute.xlu0 %1126
        %1128 = vrot.lane.b32.xlu0 %v1035, 20
        %v1129 = vpop.permute.xlu0 %1128
        %1130 = vrot.lane.b32.xlu0 %v1036, 20
        %v1131 = vpop.permute.xlu0 %1130
        %1132 = vrot.lane.b32.xlu0 %v1037, 20
        %v1133 = vpop.permute.xlu0 %1132
        %vm1166 = vcmask 195744
        %1167 = vst.msk [vmem:[#allocation2] sm:$0xff] %vm1166, %v1071
        %1168 = vst.msk [vmem:[#allocation2 + $0x8] sm:$0xff] %vm1166, %v1073
        %1169 = vst.msk [vmem:[#allocation2 + $0x10] sm:$0xff] %vm1166, %v1075
        %1170 = vst.msk [vmem:[#allocation2 + $0x18] sm:$0xff] %vm1166, %v1077
        %1171 = vst.msk [vmem:[#allocation2 + $0x20] sm:$0xff] %vm1166, %v1079
        %1172 = vst.msk [vmem:[#allocation2 + $0x28] sm:$0xff] %vm1166, %v1081
        %1173 = vst.msk [vmem:[#allocation2 + $0x30] sm:$0xff] %vm1166, %v1083
        %1174 = vst.msk [vmem:[#allocation2 + $0x38] sm:$0xff] %vm1166, %v1085
        %1175 = vst.msk [vmem:[#allocation2 + $0x40] sm:$0xff] %vm1166, %v1087
        %1176 = vst.msk [vmem:[#allocation2 + $0x48] sm:$0xff] %vm1166, %v1089
        %1177 = vst.msk [vmem:[#allocation2 + $0x50] sm:$0xff] %vm1166, %v1091
        %1178 = vst.msk [vmem:[#allocation2 + $0x58] sm:$0xff] %vm1166, %v1093
        %1179 = vst.msk [vmem:[#allocation2 + $0x60] sm:$0xff] %vm1166, %v1095
        %1180 = vst.msk [vmem:[#allocation2 + $0x68] sm:$0xff] %vm1166, %v1097
        %1181 = vst.msk [vmem:[#allocation2 + $0x70] sm:$0xff] %vm1166, %v1099
        %1182 = vst.msk [vmem:[#allocation2 + $0x78] sm:$0xff] %vm1166, %v1101
        %1183 = vst.msk [vmem:[#allocation2 + $0x80] sm:$0xff] %vm1166, %v1103
        %1184 = vst.msk [vmem:[#allocation2 + $0x88] sm:$0xff] %vm1166, %v1105
        %1185 = vst.msk [vmem:[#allocation2 + $0x90] sm:$0xff] %vm1166, %v1107
        %1186 = vst.msk [vmem:[#allocation2 + $0x98] sm:$0xff] %vm1166, %v1109
        %1187 = vst.msk [vmem:[#allocation2 + $0xa0] sm:$0xff] %vm1166, %v1111
        %1188 = vst.msk [vmem:[#allocation2 + $0xa8] sm:$0xff] %vm1166, %v1113
        %1189 = vst.msk [vmem:[#allocation2 + $0xb0] sm:$0xff] %vm1166, %v1115
        %1190 = vst.msk [vmem:[#allocation2 + $0xb8] sm:$0xff] %vm1166, %v1117
        %1191 = vst.msk [vmem:[#allocation2 + $0xc0] sm:$0xff] %vm1166, %v1119
        %1192 = vst.msk [vmem:[#allocation2 + $0xc8] sm:$0xff] %vm1166, %v1121
        %1193 = vst.msk [vmem:[#allocation2 + $0xd0] sm:$0xff] %vm1166, %v1123
        %1194 = vst.msk [vmem:[#allocation2 + $0xd8] sm:$0xff] %vm1166, %v1125
        %1195 = vst.msk [vmem:[#allocation2 + $0xe0] sm:$0xff] %vm1166, %v1127
        %1196 = vst.msk [vmem:[#allocation2 + $0xe8] sm:$0xff] %vm1166, %v1129
        %1197 = vst.msk [vmem:[#allocation2 + $0xf0] sm:$0xff] %vm1166, %v1131
        %1198 = vst.msk [vmem:[#allocation2 + $0xf8] sm:$0xff] %vm1166, %v1133
        %s1199 = scalar_lea.vmem %s155, 48
        %v1200 = vld [vmem:[%s1199] sm:$0xff]
        %v1201 = vld [vmem:[%s1199 + $0x8] sm:$0xff]
        %v1202 = vld [vmem:[%s1199 + $0x18] sm:$0xff]
        %v1203 = vld [vmem:[%s1199 + $0x20] sm:$0xff]
        %v1204 = vld [vmem:[%s1199 + $0x30] sm:$0xff]
        %v1205 = vld [vmem:[%s1199 + $0x38] sm:$0xff]
        %v1206 = vld [vmem:[%s1199 + $0x48] sm:$0xff]
        %v1207 = vld [vmem:[%s1199 + $0x50] sm:$0xff]
        %v1208 = vld [vmem:[%s1199 + $0x60] sm:$0xff]
        %v1209 = vld [vmem:[%s1199 + $0x68] sm:$0xff]
        %v1210 = vld [vmem:[%s1199 + $0x78] sm:$0xff]
        %v1211 = vld [vmem:[%s1199 + $0x80] sm:$0xff]
        %v1212 = vld [vmem:[%s1199 + $0x90] sm:$0xff]
        %v1213 = vld [vmem:[%s1199 + $0x98] sm:$0xff]
        %v1214 = vld [vmem:[%s1199 + $0xa8] sm:$0xff]
        %v1215 = vld [vmem:[%s1199 + $0xb0] sm:$0xff]
        %v1216 = vld [vmem:[%s1199 + $0xc0] sm:$0xff]
        %v1217 = vld [vmem:[%s1199 + $0xc8] sm:$0xff]
        %v1218 = vld [vmem:[%s1199 + $0xd8] sm:$0xff]
        %v1219 = vld [vmem:[%s1199 + $0xe0] sm:$0xff]
        %v1220 = vld [vmem:[%s1199 + $0xf0] sm:$0xff]
        %v1221 = vld [vmem:[%s1199 + $0xf8] sm:$0xff]
        %v1222 = vld [vmem:[%s1199 + $0x108] sm:$0xff]
        %v1223 = vld [vmem:[%s1199 + $0x110] sm:$0xff]
        %v1224 = vld [vmem:[%s1199 + $0x120] sm:$0xff]
        %v1225 = vld [vmem:[%s1199 + $0x128] sm:$0xff]
        %v1226 = vld [vmem:[%s1199 + $0x138] sm:$0xff]
        %v1227 = vld [vmem:[%s1199 + $0x140] sm:$0xff]
        %v1228 = vld [vmem:[%s1199 + $0x150] sm:$0xff]
        %v1229 = vld [vmem:[%s1199 + $0x158] sm:$0xff]
        %v1230 = vld [vmem:[%s1199 + $0x168] sm:$0xff]
        %v1231 = vld [vmem:[%s1199 + $0x170] sm:$0xff]
        %1264 = vrot.lane.b32.xlu0 %v1200, 24
        %v1265 = vpop.permute.xlu0 %1264
        %1266 = vrot.lane.b32.xlu0 %v1201, 24
        %v1267 = vpop.permute.xlu0 %1266
        %1268 = vrot.lane.b32.xlu0 %v1202, 24
        %v1269 = vpop.permute.xlu0 %1268
        %1270 = vrot.lane.b32.xlu0 %v1203, 24
        %v1271 = vpop.permute.xlu0 %1270
        %1272 = vrot.lane.b32.xlu0 %v1204, 24
        %v1273 = vpop.permute.xlu0 %1272
        %1274 = vrot.lane.b32.xlu0 %v1205, 24
        %v1275 = vpop.permute.xlu0 %1274
        %1276 = vrot.lane.b32.xlu0 %v1206, 24
        %v1277 = vpop.permute.xlu0 %1276
        %1278 = vrot.lane.b32.xlu0 %v1207, 24
        %v1279 = vpop.permute.xlu0 %1278
        %1280 = vrot.lane.b32.xlu0 %v1208, 24
        %v1281 = vpop.permute.xlu0 %1280
        %1282 = vrot.lane.b32.xlu0 %v1209, 24
        %v1283 = vpop.permute.xlu0 %1282
        %1284 = vrot.lane.b32.xlu0 %v1210, 24
        %v1285 = vpop.permute.xlu0 %1284
        %1286 = vrot.lane.b32.xlu0 %v1211, 24
        %v1287 = vpop.permute.xlu0 %1286
        %1288 = vrot.lane.b32.xlu0 %v1212, 24
        %v1289 = vpop.permute.xlu0 %1288
        %1290 = vrot.lane.b32.xlu0 %v1213, 24
        %v1291 = vpop.permute.xlu0 %1290
        %1292 = vrot.lane.b32.xlu0 %v1214, 24
        %v1293 = vpop.permute.xlu0 %1292
        %1294 = vrot.lane.b32.xlu0 %v1215, 24
        %v1295 = vpop.permute.xlu0 %1294
        %1296 = vrot.lane.b32.xlu0 %v1216, 24
        %v1297 = vpop.permute.xlu0 %1296
        %1298 = vrot.lane.b32.xlu0 %v1217, 24
        %v1299 = vpop.permute.xlu0 %1298
        %1300 = vrot.lane.b32.xlu0 %v1218, 24
        %v1301 = vpop.permute.xlu0 %1300
        %1302 = vrot.lane.b32.xlu0 %v1219, 24
        %v1303 = vpop.permute.xlu0 %1302
        %1304 = vrot.lane.b32.xlu0 %v1220, 24
        %v1305 = vpop.permute.xlu0 %1304
        %1306 = vrot.lane.b32.xlu0 %v1221, 24
        %v1307 = vpop.permute.xlu0 %1306
        %1308 = vrot.lane.b32.xlu0 %v1222, 24
        %v1309 = vpop.permute.xlu0 %1308
        %1310 = vrot.lane.b32.xlu0 %v1223, 24
        %v1311 = vpop.permute.xlu0 %1310
        %1312 = vrot.lane.b32.xlu0 %v1224, 24
        %v1313 = vpop.permute.xlu0 %1312
        %1314 = vrot.lane.b32.xlu0 %v1225, 24
        %v1315 = vpop.permute.xlu0 %1314
        %1316 = vrot.lane.b32.xlu0 %v1226, 24
        %v1317 = vpop.permute.xlu0 %1316
        %1318 = vrot.lane.b32.xlu0 %v1227, 24
        %v1319 = vpop.permute.xlu0 %1318
        %1320 = vrot.lane.b32.xlu0 %v1228, 24
        %v1321 = vpop.permute.xlu0 %1320
        %1322 = vrot.lane.b32.xlu0 %v1229, 24
        %v1323 = vpop.permute.xlu0 %1322
        %1324 = vrot.lane.b32.xlu0 %v1230, 24
        %v1325 = vpop.permute.xlu0 %1324
        %1326 = vrot.lane.b32.xlu0 %v1231, 24
        %v1327 = vpop.permute.xlu0 %1326
        %vm1360 = vcmask 228544
        %1361 = vst.msk [vmem:[#allocation2] sm:$0xff] %vm1360, %v1265
        %1362 = vst.msk [vmem:[#allocation2 + $0x8] sm:$0xff] %vm1360, %v1267
        %1363 = vst.msk [vmem:[#allocation2 + $0x10] sm:$0xff] %vm1360, %v1269
        %1364 = vst.msk [vmem:[#allocation2 + $0x18] sm:$0xff] %vm1360, %v1271
        %1365 = vst.msk [vmem:[#allocation2 + $0x20] sm:$0xff] %vm1360, %v1273
        %1366 = vst.msk [vmem:[#allocation2 + $0x28] sm:$0xff] %vm1360, %v1275
        %1367 = vst.msk [vmem:[#allocation2 + $0x30] sm:$0xff] %vm1360, %v1277
        %1368 = vst.msk [vmem:[#allocation2 + $0x38] sm:$0xff] %vm1360, %v1279
        %1369 = vst.msk [vmem:[#allocation2 + $0x40] sm:$0xff] %vm1360, %v1281
        %1370 = vst.msk [vmem:[#allocation2 + $0x48] sm:$0xff] %vm1360, %v1283
        %1371 = vst.msk [vmem:[#allocation2 + $0x50] sm:$0xff] %vm1360, %v1285
        %1372 = vst.msk [vmem:[#allocation2 + $0x58] sm:$0xff] %vm1360, %v1287
        %1373 = vst.msk [vmem:[#allocation2 + $0x60] sm:$0xff] %vm1360, %v1289
        %1374 = vst.msk [vmem:[#allocation2 + $0x68] sm:$0xff] %vm1360, %v1291
        %1375 = vst.msk [vmem:[#allocation2 + $0x70] sm:$0xff] %vm1360, %v1293
        %1376 = vst.msk [vmem:[#allocation2 + $0x78] sm:$0xff] %vm1360, %v1295
        %1377 = vst.msk [vmem:[#allocation2 + $0x80] sm:$0xff] %vm1360, %v1297
        %1378 = vst.msk [vmem:[#allocation2 + $0x88] sm:$0xff] %vm1360, %v1299
        %1379 = vst.msk [vmem:[#allocation2 + $0x90] sm:$0xff] %vm1360, %v1301
        %1380 = vst.msk [vmem:[#allocation2 + $0x98] sm:$0xff] %vm1360, %v1303
        %1381 = vst.msk [vmem:[#allocation2 + $0xa0] sm:$0xff] %vm1360, %v1305
        %1382 = vst.msk [vmem:[#allocation2 + $0xa8] sm:$0xff] %vm1360, %v1307
        %1383 = vst.msk [vmem:[#allocation2 + $0xb0] sm:$0xff] %vm1360, %v1309
        %1384 = vst.msk [vmem:[#allocation2 + $0xb8] sm:$0xff] %vm1360, %v1311
        %1385 = vst.msk [vmem:[#allocation2 + $0xc0] sm:$0xff] %vm1360, %v1313
        %1386 = vst.msk [vmem:[#allocation2 + $0xc8] sm:$0xff] %vm1360, %v1315
        %1387 = vst.msk [vmem:[#allocation2 + $0xd0] sm:$0xff] %vm1360, %v1317
        %1388 = vst.msk [vmem:[#allocation2 + $0xd8] sm:$0xff] %vm1360, %v1319
        %1389 = vst.msk [vmem:[#allocation2 + $0xe0] sm:$0xff] %vm1360, %v1321
        %1390 = vst.msk [vmem:[#allocation2 + $0xe8] sm:$0xff] %vm1360, %v1323
        %1391 = vst.msk [vmem:[#allocation2 + $0xf0] sm:$0xff] %vm1360, %v1325
        %1392 = vst.msk [vmem:[#allocation2 + $0xf8] sm:$0xff] %vm1360, %v1327
        %v1393 = vld [vmem:[%s1199 + $0x1] sm:$0xff]
        %v1394 = vld [vmem:[%s1199 + $0x9] sm:$0xff]
        %v1395 = vld [vmem:[%s1199 + $0x19] sm:$0xff]
        %v1396 = vld [vmem:[%s1199 + $0x21] sm:$0xff]
        %v1397 = vld [vmem:[%s1199 + $0x31] sm:$0xff]
        %v1398 = vld [vmem:[%s1199 + $0x39] sm:$0xff]
        %v1399 = vld [vmem:[%s1199 + $0x49] sm:$0xff]
        %v1400 = vld [vmem:[%s1199 + $0x51] sm:$0xff]
        %v1401 = vld [vmem:[%s1199 + $0x61] sm:$0xff]
        %v1402 = vld [vmem:[%s1199 + $0x69] sm:$0xff]
        %v1403 = vld [vmem:[%s1199 + $0x79] sm:$0xff]
        %v1404 = vld [vmem:[%s1199 + $0x81] sm:$0xff]
        %v1405 = vld [vmem:[%s1199 + $0x91] sm:$0xff]
        %v1406 = vld [vmem:[%s1199 + $0x99] sm:$0xff]
        %v1407 = vld [vmem:[%s1199 + $0xa9] sm:$0xff]
        %v1408 = vld [vmem:[%s1199 + $0xb1] sm:$0xff]
        %v1409 = vld [vmem:[%s1199 + $0xc1] sm:$0xff]
        %v1410 = vld [vmem:[%s1199 + $0xc9] sm:$0xff]
        %v1411 = vld [vmem:[%s1199 + $0xd9] sm:$0xff]
        %v1412 = vld [vmem:[%s1199 + $0xe1] sm:$0xff]
        %v1413 = vld [vmem:[%s1199 + $0xf1] sm:$0xff]
        %v1414 = vld [vmem:[%s1199 + $0xf9] sm:$0xff]
        %v1415 = vld [vmem:[%s1199 + $0x109] sm:$0xff]
        %v1416 = vld [vmem:[%s1199 + $0x111] sm:$0xff]
        %v1417 = vld [vmem:[%s1199 + $0x121] sm:$0xff]
        %v1418 = vld [vmem:[%s1199 + $0x129] sm:$0xff]
        %v1419 = vld [vmem:[%s1199 + $0x139] sm:$0xff]
        %v1420 = vld [vmem:[%s1199 + $0x141] sm:$0xff]
        %v1421 = vld [vmem:[%s1199 + $0x151] sm:$0xff]
        %v1422 = vld [vmem:[%s1199 + $0x159] sm:$0xff]
        %v1423 = vld [vmem:[%s1199 + $0x169] sm:$0xff]
        %v1424 = vld [vmem:[%s1199 + $0x171] sm:$0xff]
        %1457 = vrot.lane.b32.xlu0 %v1393, 28
        %v1458 = vpop.permute.xlu0 %1457
        %1459 = vrot.lane.b32.xlu0 %v1394, 28
        %v1460 = vpop.permute.xlu0 %1459
        %1461 = vrot.lane.b32.xlu0 %v1395, 28
        %v1462 = vpop.permute.xlu0 %1461
        %1463 = vrot.lane.b32.xlu0 %v1396, 28
        %v1464 = vpop.permute.xlu0 %1463
        %1465 = vrot.lane.b32.xlu0 %v1397, 28
        %v1466 = vpop.permute.xlu0 %1465
        %1467 = vrot.lane.b32.xlu0 %v1398, 28
        %v1468 = vpop.permute.xlu0 %1467
        %1469 = vrot.lane.b32.xlu0 %v1399, 28
        %v1470 = vpop.permute.xlu0 %1469
        %1471 = vrot.lane.b32.xlu0 %v1400, 28
        %v1472 = vpop.permute.xlu0 %1471
        %1473 = vrot.lane.b32.xlu0 %v1401, 28
        %v1474 = vpop.permute.xlu0 %1473
        %1475 = vrot.lane.b32.xlu0 %v1402, 28
        %v1476 = vpop.permute.xlu0 %1475
        %1477 = vrot.lane.b32.xlu0 %v1403, 28
        %v1478 = vpop.permute.xlu0 %1477
        %1479 = vrot.lane.b32.xlu0 %v1404, 28
        %v1480 = vpop.permute.xlu0 %1479
        %1481 = vrot.lane.b32.xlu0 %v1405, 28
        %v1482 = vpop.permute.xlu0 %1481
        %1483 = vrot.lane.b32.xlu0 %v1406, 28
        %v1484 = vpop.permute.xlu0 %1483
        %1485 = vrot.lane.b32.xlu0 %v1407, 28
        %v1486 = vpop.permute.xlu0 %1485
        %1487 = vrot.lane.b32.xlu0 %v1408, 28
        %v1488 = vpop.permute.xlu0 %1487
        %1489 = vrot.lane.b32.xlu0 %v1409, 28
        %v1490 = vpop.permute.xlu0 %1489
        %1491 = vrot.lane.b32.xlu0 %v1410, 28
        %v1492 = vpop.permute.xlu0 %1491
        %1493 = vrot.lane.b32.xlu0 %v1411, 28
        %v1494 = vpop.permute.xlu0 %1493
        %1495 = vrot.lane.b32.xlu0 %v1412, 28
        %v1496 = vpop.permute.xlu0 %1495
        %1497 = vrot.lane.b32.xlu0 %v1413, 28
        %v1498 = vpop.permute.xlu0 %1497
        %1499 = vrot.lane.b32.xlu0 %v1414, 28
        %v1500 = vpop.permute.xlu0 %1499
        %1501 = vrot.lane.b32.xlu0 %v1415, 28
        %v1502 = vpop.permute.xlu0 %1501
        %1503 = vrot.lane.b32.xlu0 %v1416, 28
        %v1504 = vpop.permute.xlu0 %1503
        %1505 = vrot.lane.b32.xlu0 %v1417, 28
        %v1506 = vpop.permute.xlu0 %1505
        %1507 = vrot.lane.b32.xlu0 %v1418, 28
        %v1508 = vpop.permute.xlu0 %1507
        %1509 = vrot.lane.b32.xlu0 %v1419, 28
        %v1510 = vpop.permute.xlu0 %1509
        %1511 = vrot.lane.b32.xlu0 %v1420, 28
        %v1512 = vpop.permute.xlu0 %1511
        %1513 = vrot.lane.b32.xlu0 %v1421, 28
        %v1514 = vpop.permute.xlu0 %1513
        %1515 = vrot.lane.b32.xlu0 %v1422, 28
        %v1516 = vpop.permute.xlu0 %1515
        %1517 = vrot.lane.b32.xlu0 %v1423, 28
        %v1518 = vpop.permute.xlu0 %1517
        %1519 = vrot.lane.b32.xlu0 %v1424, 28
        %v1520 = vpop.permute.xlu0 %1519
        %vm1553 = vcmask 261344
        %1554 = vst.msk [vmem:[#allocation2] sm:$0xff] %vm1553, %v1458
        %1555 = vst.msk [vmem:[#allocation2 + $0x8] sm:$0xff] %vm1553, %v1460
        %1556 = vst.msk [vmem:[#allocation2 + $0x10] sm:$0xff] %vm1553, %v1462
        %1557 = vst.msk [vmem:[#allocation2 + $0x18] sm:$0xff] %vm1553, %v1464
        %1558 = vst.msk [vmem:[#allocation2 + $0x20] sm:$0xff] %vm1553, %v1466
        %1559 = vst.msk [vmem:[#allocation2 + $0x28] sm:$0xff] %vm1553, %v1468
        %1560 = vst.msk [vmem:[#allocation2 + $0x30] sm:$0xff] %vm1553, %v1470
        %1561 = vst.msk [vmem:[#allocation2 + $0x38] sm:$0xff] %vm1553, %v1472
        %1562 = vst.msk [vmem:[#allocation2 + $0x40] sm:$0xff] %vm1553, %v1474
        %1563 = vst.msk [vmem:[#allocation2 + $0x48] sm:$0xff] %vm1553, %v1476
        %1564 = vst.msk [vmem:[#allocation2 + $0x50] sm:$0xff] %vm1553, %v1478
        %1565 = vst.msk [vmem:[#allocation2 + $0x58] sm:$0xff] %vm1553, %v1480
        %1566 = vst.msk [vmem:[#allocation2 + $0x60] sm:$0xff] %vm1553, %v1482
        %1567 = vst.msk [vmem:[#allocation2 + $0x68] sm:$0xff] %vm1553, %v1484
        %1568 = vst.msk [vmem:[#allocation2 + $0x70] sm:$0xff] %vm1553, %v1486
        %1569 = vst.msk [vmem:[#allocation2 + $0x78] sm:$0xff] %vm1553, %v1488
        %1570 = vst.msk [vmem:[#allocation2 + $0x80] sm:$0xff] %vm1553, %v1490
        %1571 = vst.msk [vmem:[#allocation2 + $0x88] sm:$0xff] %vm1553, %v1492
        %1572 = vst.msk [vmem:[#allocation2 + $0x90] sm:$0xff] %vm1553, %v1494
        %1573 = vst.msk [vmem:[#allocation2 + $0x98] sm:$0xff] %vm1553, %v1496
        %1574 = vst.msk [vmem:[#allocation2 + $0xa0] sm:$0xff] %vm1553, %v1498
        %1575 = vst.msk [vmem:[#allocation2 + $0xa8] sm:$0xff] %vm1553, %v1500
        %1576 = vst.msk [vmem:[#allocation2 + $0xb0] sm:$0xff] %vm1553, %v1502
        %1577 = vst.msk [vmem:[#allocation2 + $0xb8] sm:$0xff] %vm1553, %v1504
        %1578 = vst.msk [vmem:[#allocation2 + $0xc0] sm:$0xff] %vm1553, %v1506
        %1579 = vst.msk [vmem:[#allocation2 + $0xc8] sm:$0xff] %vm1553, %v1508
        %1580 = vst.msk [vmem:[#allocation2 + $0xd0] sm:$0xff] %vm1553, %v1510
        %1581 = vst.msk [vmem:[#allocation2 + $0xd8] sm:$0xff] %vm1553, %v1512
        %1582 = vst.msk [vmem:[#allocation2 + $0xe0] sm:$0xff] %vm1553, %v1514
        %1583 = vst.msk [vmem:[#allocation2 + $0xe8] sm:$0xff] %vm1553, %v1516
        %1584 = vst.msk [vmem:[#allocation2 + $0xf0] sm:$0xff] %vm1553, %v1518
        %1585 = vst.msk [vmem:[#allocation2 + $0xf8] sm:$0xff] %vm1553, %v1520
        %v1586 = vld [vmem:[%s1199 + $0x2] sm:$0xff]
        %v1587 = vld [vmem:[%s1199 + $0xa] sm:$0xff]
        %v1588 = vld [vmem:[%s1199 + $0x1a] sm:$0xff]
        %v1589 = vld [vmem:[%s1199 + $0x22] sm:$0xff]
        %v1590 = vld [vmem:[%s1199 + $0x32] sm:$0xff]
        %v1591 = vld [vmem:[%s1199 + $0x3a] sm:$0xff]
        %v1592 = vld [vmem:[%s1199 + $0x4a] sm:$0xff]
        %v1593 = vld [vmem:[%s1199 + $0x52] sm:$0xff]
        %v1594 = vld [vmem:[%s1199 + $0x62] sm:$0xff]
        %v1595 = vld [vmem:[%s1199 + $0x6a] sm:$0xff]
        %v1596 = vld [vmem:[%s1199 + $0x7a] sm:$0xff]
        %v1597 = vld [vmem:[%s1199 + $0x82] sm:$0xff]
        %v1598 = vld [vmem:[%s1199 + $0x92] sm:$0xff]
        %v1599 = vld [vmem:[%s1199 + $0x9a] sm:$0xff]
        %v1600 = vld [vmem:[%s1199 + $0xaa] sm:$0xff]
        %v1601 = vld [vmem:[%s1199 + $0xb2] sm:$0xff]
        %v1602 = vld [vmem:[%s1199 + $0xc2] sm:$0xff]
        %v1603 = vld [vmem:[%s1199 + $0xca] sm:$0xff]
        %v1604 = vld [vmem:[%s1199 + $0xda] sm:$0xff]
        %v1605 = vld [vmem:[%s1199 + $0xe2] sm:$0xff]
        %v1606 = vld [vmem:[%s1199 + $0xf2] sm:$0xff]
        %v1607 = vld [vmem:[%s1199 + $0xfa] sm:$0xff]
        %v1608 = vld [vmem:[%s1199 + $0x10a] sm:$0xff]
        %v1609 = vld [vmem:[%s1199 + $0x112] sm:$0xff]
        %v1610 = vld [vmem:[%s1199 + $0x122] sm:$0xff]
        %v1611 = vld [vmem:[%s1199 + $0x12a] sm:$0xff]
        %v1612 = vld [vmem:[%s1199 + $0x13a] sm:$0xff]
        %v1613 = vld [vmem:[%s1199 + $0x142] sm:$0xff]
        %v1614 = vld [vmem:[%s1199 + $0x152] sm:$0xff]
        %v1615 = vld [vmem:[%s1199 + $0x15a] sm:$0xff]
        %v1616 = vld [vmem:[%s1199 + $0x16a] sm:$0xff]
        %v1617 = vld [vmem:[%s1199 + $0x172] sm:$0xff]
        %1650 = vrot.lane.b32.xlu0 %v1586, 32
        %v1651 = vpop.permute.xlu0 %1650
        %1652 = vrot.lane.b32.xlu0 %v1587, 32
        %v1653 = vpop.permute.xlu0 %1652
        %1654 = vrot.lane.b32.xlu0 %v1588, 32
        %v1655 = vpop.permute.xlu0 %1654
        %1656 = vrot.lane.b32.xlu0 %v1589, 32
        %v1657 = vpop.permute.xlu0 %1656
        %1658 = vrot.lane.b32.xlu0 %v1590, 32
        %v1659 = vpop.permute.xlu0 %1658
        %1660 = vrot.lane.b32.xlu0 %v1591, 32
        %v1661 = vpop.permute.xlu0 %1660
        %1662 = vrot.lane.b32.xlu0 %v1592, 32
        %v1663 = vpop.permute.xlu0 %1662
        %1664 = vrot.lane.b32.xlu0 %v1593, 32
        %v1665 = vpop.permute.xlu0 %1664
        %1666 = vrot.lane.b32.xlu0 %v1594, 32
        %v1667 = vpop.permute.xlu0 %1666
        %1668 = vrot.lane.b32.xlu0 %v1595, 32
        %v1669 = vpop.permute.xlu0 %1668
        %1670 = vrot.lane.b32.xlu0 %v1596, 32
        %v1671 = vpop.permute.xlu0 %1670
        %1672 = vrot.lane.b32.xlu0 %v1597, 32
        %v1673 = vpop.permute.xlu0 %1672
        %1674 = vrot.lane.b32.xlu0 %v1598, 32
        %v1675 = vpop.permute.xlu0 %1674
        %1676 = vrot.lane.b32.xlu0 %v1599, 32
        %v1677 = vpop.permute.xlu0 %1676
        %1678 = vrot.lane.b32.xlu0 %v1600, 32
        %v1679 = vpop.permute.xlu0 %1678
        %1680 = vrot.lane.b32.xlu0 %v1601, 32
        %v1681 = vpop.permute.xlu0 %1680
        %1682 = vrot.lane.b32.xlu0 %v1602, 32
        %v1683 = vpop.permute.xlu0 %1682
        %1684 = vrot.lane.b32.xlu0 %v1603, 32
        %v1685 = vpop.permute.xlu0 %1684
        %1686 = vrot.lane.b32.xlu0 %v1604, 32
        %v1687 = vpop.permute.xlu0 %1686
        %1688 = vrot.lane.b32.xlu0 %v1605, 32
        %v1689 = vpop.permute.xlu0 %1688
        %1690 = vrot.lane.b32.xlu0 %v1606, 32
        %v1691 = vpop.permute.xlu0 %1690
        %1692 = vrot.lane.b32.xlu0 %v1607, 32
        %v1693 = vpop.permute.xlu0 %1692
        %1694 = vrot.lane.b32.xlu0 %v1608, 32
        %v1695 = vpop.permute.xlu0 %1694
        %1696 = vrot.lane.b32.xlu0 %v1609, 32
        %v1697 = vpop.permute.xlu0 %1696
        %1698 = vrot.lane.b32.xlu0 %v1610, 32
        %v1699 = vpop.permute.xlu0 %1698
        %1700 = vrot.lane.b32.xlu0 %v1611, 32
        %v1701 = vpop.permute.xlu0 %1700
        %1702 = vrot.lane.b32.xlu0 %v1612, 32
        %v1703 = vpop.permute.xlu0 %1702
        %1704 = vrot.lane.b32.xlu0 %v1613, 32
        %v1705 = vpop.permute.xlu0 %1704
        %1706 = vrot.lane.b32.xlu0 %v1614, 32
        %v1707 = vpop.permute.xlu0 %1706
        %1708 = vrot.lane.b32.xlu0 %v1615, 32
        %v1709 = vpop.permute.xlu0 %1708
        %1710 = vrot.lane.b32.xlu0 %v1616, 32
        %v1711 = vpop.permute.xlu0 %1710
        %1712 = vrot.lane.b32.xlu0 %v1617, 32
        %v1713 = vpop.permute.xlu0 %1712
        %vm1746 = vcmask 294144
        %1747 = vst.msk [vmem:[#allocation2] sm:$0xff] %vm1746, %v1651
        %1748 = vst.msk [vmem:[#allocation2 + $0x8] sm:$0xff] %vm1746, %v1653
        %1749 = vst.msk [vmem:[#allocation2 + $0x10] sm:$0xff] %vm1746, %v1655
        %1750 = vst.msk [vmem:[#allocation2 + $0x18] sm:$0xff] %vm1746, %v1657
        %1751 = vst.msk [vmem:[#allocation2 + $0x20] sm:$0xff] %vm1746, %v1659
        %1752 = vst.msk [vmem:[#allocation2 + $0x28] sm:$0xff] %vm1746, %v1661
        %1753 = vst.msk [vmem:[#allocation2 + $0x30] sm:$0xff] %vm1746, %v1663
        %1754 = vst.msk [vmem:[#allocation2 + $0x38] sm:$0xff] %vm1746, %v1665
        %1755 = vst.msk [vmem:[#allocation2 + $0x40] sm:$0xff] %vm1746, %v1667
        %1756 = vst.msk [vmem:[#allocation2 + $0x48] sm:$0xff] %vm1746, %v1669
        %1757 = vst.msk [vmem:[#allocation2 + $0x50] sm:$0xff] %vm1746, %v1671
        %1758 = vst.msk [vmem:[#allocation2 + $0x58] sm:$0xff] %vm1746, %v1673
        %1759 = vst.msk [vmem:[#allocation2 + $0x60] sm:$0xff] %vm1746, %v1675
        %1760 = vst.msk [vmem:[#allocation2 + $0x68] sm:$0xff] %vm1746, %v1677
        %1761 = vst.msk [vmem:[#allocation2 + $0x70] sm:$0xff] %vm1746, %v1679
        %1762 = vst.msk [vmem:[#allocation2 + $0x78] sm:$0xff] %vm1746, %v1681
        %1763 = vst.msk [vmem:[#allocation2 + $0x80] sm:$0xff] %vm1746, %v1683
        %1764 = vst.msk [vmem:[#allocation2 + $0x88] sm:$0xff] %vm1746, %v1685
        %1765 = vst.msk [vmem:[#allocation2 + $0x90] sm:$0xff] %vm1746, %v1687
        %1766 = vst.msk [vmem:[#allocation2 + $0x98] sm:$0xff] %vm1746, %v1689
        %1767 = vst.msk [vmem:[#allocation2 + $0xa0] sm:$0xff] %vm1746, %v1691
        %1768 = vst.msk [vmem:[#allocation2 + $0xa8] sm:$0xff] %vm1746, %v1693
        %1769 = vst.msk [vmem:[#allocation2 + $0xb0] sm:$0xff] %vm1746, %v1695
        %1770 = vst.msk [vmem:[#allocation2 + $0xb8] sm:$0xff] %vm1746, %v1697
        %1771 = vst.msk [vmem:[#allocation2 + $0xc0] sm:$0xff] %vm1746, %v1699
        %1772 = vst.msk [vmem:[#allocation2 + $0xc8] sm:$0xff] %vm1746, %v1701
        %1773 = vst.msk [vmem:[#allocation2 + $0xd0] sm:$0xff] %vm1746, %v1703
        %1774 = vst.msk [vmem:[#allocation2 + $0xd8] sm:$0xff] %vm1746, %v1705
        %1775 = vst.msk [vmem:[#allocation2 + $0xe0] sm:$0xff] %vm1746, %v1707
        %1776 = vst.msk [vmem:[#allocation2 + $0xe8] sm:$0xff] %vm1746, %v1709
        %1777 = vst.msk [vmem:[#allocation2 + $0xf0] sm:$0xff] %vm1746, %v1711
        %1778 = vst.msk [vmem:[#allocation2 + $0xf8] sm:$0xff] %vm1746, %v1713
        %vm1779 = vcmask 302368
        %1780 = vst.msk [vmem:[#allocation2] sm:$0xff] %vm1779, 1.0
        %1781 = vst.msk [vmem:[#allocation2 + $0x8] sm:$0xff] %vm1779, 1.0
        %1782 = vst.msk [vmem:[#allocation2 + $0x10] sm:$0xff] %vm1779, 1.0
        %1783 = vst.msk [vmem:[#allocation2 + $0x18] sm:$0xff] %vm1779, 1.0
        %1784 = vst.msk [vmem:[#allocation2 + $0x20] sm:$0xff] %vm1779, 1.0
        %1785 = vst.msk [vmem:[#allocation2 + $0x28] sm:$0xff] %vm1779, 1.0
        %1786 = vst.msk [vmem:[#allocation2 + $0x30] sm:$0xff] %vm1779, 1.0
        %1787 = vst.msk [vmem:[#allocation2 + $0x38] sm:$0xff] %vm1779, 1.0
        %1788 = vst.msk [vmem:[#allocation2 + $0x40] sm:$0xff] %vm1779, 1.0
        %1789 = vst.msk [vmem:[#allocation2 + $0x48] sm:$0xff] %vm1779, 1.0
        %1790 = vst.msk [vmem:[#allocation2 + $0x50] sm:$0xff] %vm1779, 1.0
        %1791 = vst.msk [vmem:[#allocation2 + $0x58] sm:$0xff] %vm1779, 1.0
        %1792 = vst.msk [vmem:[#allocation2 + $0x60] sm:$0xff] %vm1779, 1.0
        %1793 = vst.msk [vmem:[#allocation2 + $0x68] sm:$0xff] %vm1779, 1.0
        %1794 = vst.msk [vmem:[#allocation2 + $0x70] sm:$0xff] %vm1779, 1.0
        %1795 = vst.msk [vmem:[#allocation2 + $0x78] sm:$0xff] %vm1779, 1.0
        %1796 = vst.msk [vmem:[#allocation2 + $0x80] sm:$0xff] %vm1779, 1.0
        %1797 = vst.msk [vmem:[#allocation2 + $0x88] sm:$0xff] %vm1779, 1.0
        %1798 = vst.msk [vmem:[#allocation2 + $0x90] sm:$0xff] %vm1779, 1.0
        %1799 = vst.msk [vmem:[#allocation2 + $0x98] sm:$0xff] %vm1779, 1.0
        %1800 = vst.msk [vmem:[#allocation2 + $0xa0] sm:$0xff] %vm1779, 1.0
        %1801 = vst.msk [vmem:[#allocation2 + $0xa8] sm:$0xff] %vm1779, 1.0
        %1802 = vst.msk [vmem:[#allocation2 + $0xb0] sm:$0xff] %vm1779, 1.0
        %1803 = vst.msk [vmem:[#allocation2 + $0xb8] sm:$0xff] %vm1779, 1.0
        %1804 = vst.msk [vmem:[#allocation2 + $0xc0] sm:$0xff] %vm1779, 1.0
        %1805 = vst.msk [vmem:[#allocation2 + $0xc8] sm:$0xff] %vm1779, 1.0
        %1806 = vst.msk [vmem:[#allocation2 + $0xd0] sm:$0xff] %vm1779, 1.0
        %1807 = vst.msk [vmem:[#allocation2 + $0xd8] sm:$0xff] %vm1779, 1.0
        %1808 = vst.msk [vmem:[#allocation2 + $0xe0] sm:$0xff] %vm1779, 1.0
        %1809 = vst.msk [vmem:[#allocation2 + $0xe8] sm:$0xff] %vm1779, 1.0
        %1810 = vst.msk [vmem:[#allocation2 + $0xf0] sm:$0xff] %vm1779, 1.0
        %1811 = vst.msk [vmem:[#allocation2 + $0xf8] sm:$0xff] %vm1779, 1.0
      $region32: #{tpu_custom_call.1} parent=27 // pred_fallthru
        _
      %v1812 = vld [vmem:[#allocation2] sm:$0xff]
      %v1813 = vld [vmem:[#allocation2 + $0x8] sm:$0xff]
      %v1814 = vld [vmem:[#allocation2 + $0x10] sm:$0xff]
      %v1815 = vld [vmem:[#allocation2 + $0x18] sm:$0xff]
      %v1816 = vld [vmem:[#allocation2 + $0x20] sm:$0xff]
      %v1817 = vld [vmem:[#allocation2 + $0x28] sm:$0xff]
      %v1818 = vld [vmem:[#allocation2 + $0x30] sm:$0xff]
      %v1819 = vld [vmem:[#allocation2 + $0x38] sm:$0xff]
      %v1820 = vld [vmem:[#allocation2 + $0x40] sm:$0xff]
      %v1821 = vld [vmem:[#allocation2 + $0x48] sm:$0xff]
      %v1822 = vld [vmem:[#allocation2 + $0x50] sm:$0xff]
      %v1823 = vld [vmem:[#allocation2 + $0x58] sm:$0xff]
      %v1824 = vld [vmem:[#allocation2 + $0x60] sm:$0xff]
      %v1825 = vld [vmem:[#allocation2 + $0x68] sm:$0xff]
      %v1826 = vld [vmem:[#allocation2 + $0x70] sm:$0xff]
      %v1827 = vld [vmem:[#allocation2 + $0x78] sm:$0xff]
      %v1828 = vld [vmem:[#allocation2 + $0x80] sm:$0xff]
      %v1829 = vld [vmem:[#allocation2 + $0x88] sm:$0xff]
      %v1830 = vld [vmem:[#allocation2 + $0x90] sm:$0xff]
      %v1831 = vld [vmem:[#allocation2 + $0x98] sm:$0xff]
      %v1832 = vld [vmem:[#allocation2 + $0xa0] sm:$0xff]
      %v1833 = vld [vmem:[#allocation2 + $0xa8] sm:$0xff]
      %v1834 = vld [vmem:[#allocation2 + $0xb0] sm:$0xff]
      %v1835 = vld [vmem:[#allocation2 + $0xb8] sm:$0xff]
      %v1836 = vld [vmem:[#allocation2 + $0xc0] sm:$0xff]
      %v1837 = vld [vmem:[#allocation2 + $0xc8] sm:$0xff]
      %v1838 = vld [vmem:[#allocation2 + $0xd0] sm:$0xff]
      %v1839 = vld [vmem:[#allocation2 + $0xd8] sm:$0xff]
      %v1840 = vld [vmem:[#allocation2 + $0xe0] sm:$0xff]
      %v1841 = vld [vmem:[#allocation2 + $0xe8] sm:$0xff]
      %v1842 = vld [vmem:[#allocation2 + $0xf0] sm:$0xff]
      %v1843 = vld [vmem:[#allocation2 + $0xf8] sm:$0xff]
      %s1844 = smul.u32 %s18, 40
      %s1845 = scalar_lea.vmem %s1, %s1844
      %v1846 = vld [vmem:[%s1845] sm:$0xff]
      %v1847 = vld [vmem:[%s1845 + $0x8] sm:$0xff]
      %v1848 = vld [vmem:[%s1845 + $0x10] sm:$0xff]
      %v1849 = vld [vmem:[%s1845 + $0x18] sm:$0xff]
      %v1850 = vld [vmem:[%s1845 + $0x20] sm:$0x1f]
      %vm1851 = vcmask 302080
      %v1853 = vsel %vm1851, %v1812, 0
      %v1856 = vsel %vm1851, %v1813, 0
      %v1859 = vsel %vm1851, %v1814, 0
      %v1862 = vsel %vm1851, %v1815, 0
      %v1865 = vsel %vm1851, %v1816, 0
      %v1868 = vsel %vm1851, %v1817, 0
      %v1871 = vsel %vm1851, %v1818, 0
      %v1874 = vsel %vm1851, %v1819, 0
      %v1877 = vsel %vm1851, %v1820, 0
      %v1880 = vsel %vm1851, %v1821, 0
      %v1883 = vsel %vm1851, %v1822, 0
      %v1886 = vsel %vm1851, %v1823, 0
      %v1889 = vsel %vm1851, %v1824, 0
      %v1892 = vsel %vm1851, %v1825, 0
      %v1895 = vsel %vm1851, %v1826, 0
      %v1898 = vsel %vm1851, %v1827, 0
      %v1901 = vsel %vm1851, %v1828, 0
      %v1904 = vsel %vm1851, %v1829, 0
      %v1907 = vsel %vm1851, %v1830, 0
      %v1910 = vsel %vm1851, %v1831, 0
      %v1913 = vsel %vm1851, %v1832, 0
      %v1916 = vsel %vm1851, %v1833, 0
      %v1919 = vsel %vm1851, %v1834, 0
      %v1922 = vsel %vm1851, %v1835, 0
      %v1925 = vsel %vm1851, %v1836, 0
      %v1928 = vsel %vm1851, %v1837, 0
      %v1931 = vsel %vm1851, %v1838, 0
      %v1934 = vsel %vm1851, %v1839, 0
      %v1937 = vsel %vm1851, %v1840, 0
      %v1940 = vsel %vm1851, %v1841, 0
      %v1943 = vsel %vm1851, %v1842, 0
      %v1946 = vsel %vm1851, %v1843, 0
      %vm1948 = vcmask 1044480
      %v1950 = vsel %vm1948, %v1850, 0
      %1952 = vmatpush.msra.mxu0 0.0
      %1953 = vmatpush.msra.mxu0 0.0
      %1954 = vmatpush.msra.mxu0 0.0
      %1955 = vmatpush.msra.mxu0 0.0
      %1956 = vmatpush.msra.mxu0 0.0
      %1957 = vmatpush.msra.mxu0 0.0
      %1958 = vmatpush.msra.mxu0 0.0
      %1959 = vmatpush.msra.mxu0 0.0
      %1960 = vmatpush.msra.mxu0 0.0
      %1961 = vmatpush.msra.mxu0 0.0
      %1962 = vmatpush.msra.mxu0 0.0
      %1963 = vmatpush.msra.mxu0 %v1950
      %1964 = vmatpush.msra.mxu0 %v1849
      %1965 = vmatpush.msra.mxu0 %v1848
      %1966 = vmatpush.msra.mxu0 %v1847
      %1967 = vmatpush.msra.mxu0 %v1846
      %1968 = vmatmul.f32.gmra.mxu0 %v1853
      %v1969 = vpop.f32.mrf.mxu0
      %v1970 = vadd.f32 0.0, %v1969
      %1971 = vmatmul.f32.gmra.mxu0 %v1856
      %v1972 = vpop.f32.mrf.mxu0
      %v1973 = vadd.f32 0.0, %v1972
      %1974 = vmatmul.f32.gmra.mxu0 %v1859
      %v1975 = vpop.f32.mrf.mxu0
      %v1976 = vadd.f32 0.0, %v1975
      %1977 = vmatmul.f32.gmra.mxu0 %v1862
      %v1978 = vpop.f32.mrf.mxu0
      %v1979 = vadd.f32 0.0, %v1978
      %1980 = vmatmul.f32.gmra.mxu0 %v1865
      %v1981 = vpop.f32.mrf.mxu0
      %v1982 = vadd.f32 0.0, %v1981
      %1983 = vmatmul.f32.gmra.mxu0 %v1868
      %v1984 = vpop.f32.mrf.mxu0
      %v1985 = vadd.f32 0.0, %v1984
      %1986 = vmatmul.f32.gmra.mxu0 %v1871
      %v1987 = vpop.f32.mrf.mxu0
      %v1988 = vadd.f32 0.0, %v1987
      %1989 = vmatmul.f32.gmra.mxu0 %v1874
      %v1990 = vpop.f32.mrf.mxu0
      %v1991 = vadd.f32 0.0, %v1990
      %1992 = vmatmul.f32.gmra.mxu0 %v1877
      %v1993 = vpop.f32.mrf.mxu0
      %v1994 = vadd.f32 0.0, %v1993
      %1995 = vmatmul.f32.gmra.mxu0 %v1880
      %v1996 = vpop.f32.mrf.mxu0
      %v1997 = vadd.f32 0.0, %v1996
      %1998 = vmatmul.f32.gmra.mxu0 %v1883
      %v1999 = vpop.f32.mrf.mxu0
      %v2000 = vadd.f32 0.0, %v1999
      %2001 = vmatmul.f32.gmra.mxu0 %v1886
      %v2002 = vpop.f32.mrf.mxu0
      %v2003 = vadd.f32 0.0, %v2002
      %2004 = vmatmul.f32.gmra.mxu0 %v1889
      %v2005 = vpop.f32.mrf.mxu0
      %v2006 = vadd.f32 0.0, %v2005
      %2007 = vmatmul.f32.gmra.mxu0 %v1892
      %v2008 = vpop.f32.mrf.mxu0
      %v2009 = vadd.f32 0.0, %v2008
      %2010 = vmatmul.f32.gmra.mxu0 %v1895
      %v2011 = vpop.f32.mrf.mxu0
      %v2012 = vadd.f32 0.0, %v2011
      %2013 = vmatmul.f32.gmra.mxu0 %v1898
      %v2014 = vpop.f32.mrf.mxu0
      %v2015 = vadd.f32 0.0, %v2014
      %2016 = vmatmul.f32.gmra.mxu0 %v1901
      %v2017 = vpop.f32.mrf.mxu0
      %v2018 = vadd.f32 0.0, %v2017
      %2019 = vmatmul.f32.gmra.mxu0 %v1904
      %v2020 = vpop.f32.mrf.mxu0
      %v2021 = vadd.f32 0.0, %v2020
      %2022 = vmatmul.f32.gmra.mxu0 %v1907
      %v2023 = vpop.f32.mrf.mxu0
      %v2024 = vadd.f32 0.0, %v2023
      %2025 = vmatmul.f32.gmra.mxu0 %v1910
      %v2026 = vpop.f32.mrf.mxu0
      %v2027 = vadd.f32 0.0, %v2026
      %2028 = vmatmul.f32.gmra.mxu0 %v1913
      %v2029 = vpop.f32.mrf.mxu0
      %v2030 = vadd.f32 0.0, %v2029
      %2031 = vmatmul.f32.gmra.mxu0 %v1916
      %v2032 = vpop.f32.mrf.mxu0
      %v2033 = vadd.f32 0.0, %v2032
      %2034 = vmatmul.f32.gmra.mxu0 %v1919
      %v2035 = vpop.f32.mrf.mxu0
      %v2036 = vadd.f32 0.0, %v2035
      %2037 = vmatmul.f32.gmra.mxu0 %v1922
      %v2038 = vpop.f32.mrf.mxu0
      %v2039 = vadd.f32 0.0, %v2038
      %2040 = vmatmul.f32.gmra.mxu0 %v1925
      %v2041 = vpop.f32.mrf.mxu0
      %v2042 = vadd.f32 0.0, %v2041
      %2043 = vmatmul.f32.gmra.mxu0 %v1928
      %v2044 = vpop.f32.mrf.mxu0
      %v2045 = vadd.f32 0.0, %v2044
      %2046 = vmatmul.f32.gmra.mxu0 %v1931
      %v2047 = vpop.f32.mrf.mxu0
      %v2048 = vadd.f32 0.0, %v2047
      %2049 = vmatmul.f32.gmra.mxu0 %v1934
      %v2050 = vpop.f32.mrf.mxu0
      %v2051 = vadd.f32 0.0, %v2050
      %2052 = vmatmul.f32.gmra.mxu0 %v1937
      %v2053 = vpop.f32.mrf.mxu0
      %v2054 = vadd.f32 0.0, %v2053
      %2055 = vmatmul.f32.gmra.mxu0 %v1940
      %v2056 = vpop.f32.mrf.mxu0
      %v2057 = vadd.f32 0.0, %v2056
      %2058 = vmatmul.f32.gmra.mxu0 %v1943
      %v2059 = vpop.f32.mrf.mxu0
      %v2060 = vadd.f32 0.0, %v2059
      %2061 = vmatmul.f32.gmra.mxu0 %v1946
      %v2062 = vpop.f32.mrf.mxu0
      %v2063 = vadd.f32 0.0, %v2062
      %2064 = vdwg.mxu0
      %vm2065 = vcmask 130048
      %2066 = vst.msk [vmem:[%s163] sm:$0xff] %vm2065, %v1970
      %2067 = vst.msk [vmem:[%s163 + $0x8] sm:$0xff] %vm2065, %v1973
      %2068 = vst.msk [vmem:[%s163 + $0x10] sm:$0xff] %vm2065, %v1976
      %2069 = vst.msk [vmem:[%s163 + $0x18] sm:$0xff] %vm2065, %v1979
      %2070 = vst.msk [vmem:[%s163 + $0x20] sm:$0xff] %vm2065, %v1982
      %2071 = vst.msk [vmem:[%s163 + $0x28] sm:$0xff] %vm2065, %v1985
      %2072 = vst.msk [vmem:[%s163 + $0x30] sm:$0xff] %vm2065, %v1988
      %2073 = vst.msk [vmem:[%s163 + $0x38] sm:$0xff] %vm2065, %v1991
      %2074 = vst.msk [vmem:[%s163 + $0x40] sm:$0xff] %vm2065, %v1994
      %2075 = vst.msk [vmem:[%s163 + $0x48] sm:$0xff] %vm2065, %v1997
      %2076 = vst.msk [vmem:[%s163 + $0x50] sm:$0xff] %vm2065, %v2000
      %2077 = vst.msk [vmem:[%s163 + $0x58] sm:$0xff] %vm2065, %v2003
      %2078 = vst.msk [vmem:[%s163 + $0x60] sm:$0xff] %vm2065, %v2006
      %2079 = vst.msk [vmem:[%s163 + $0x68] sm:$0xff] %vm2065, %v2009
      %2080 = vst.msk [vmem:[%s163 + $0x70] sm:$0xff] %vm2065, %v2012
      %2081 = vst.msk [vmem:[%s163 + $0x78] sm:$0xff] %vm2065, %v2015
      %2082 = vst.msk [vmem:[%s163 + $0x80] sm:$0xff] %vm2065, %v2018
      %2083 = vst.msk [vmem:[%s163 + $0x88] sm:$0xff] %vm2065, %v2021
      %2084 = vst.msk [vmem:[%s163 + $0x90] sm:$0xff] %vm2065, %v2024
      %2085 = vst.msk [vmem:[%s163 + $0x98] sm:$0xff] %vm2065, %v2027
      %2086 = vst.msk [vmem:[%s163 + $0xa0] sm:$0xff] %vm2065, %v2030
      %2087 = vst.msk [vmem:[%s163 + $0xa8] sm:$0xff] %vm2065, %v2033
      %2088 = vst.msk [vmem:[%s163 + $0xb0] sm:$0xff] %vm2065, %v2036
      %2089 = vst.msk [vmem:[%s163 + $0xb8] sm:$0xff] %vm2065, %v2039
      %2090 = vst.msk [vmem:[%s163 + $0xc0] sm:$0xff] %vm2065, %v2042
      %2091 = vst.msk [vmem:[%s163 + $0xc8] sm:$0xff] %vm2065, %v2045
      %2092 = vst.msk [vmem:[%s163 + $0xd0] sm:$0xff] %vm2065, %v2048
      %2093 = vst.msk [vmem:[%s163 + $0xd8] sm:$0xff] %vm2065, %v2051
      %2094 = vst.msk [vmem:[%s163 + $0xe0] sm:$0xff] %vm2065, %v2054
      %2095 = vst.msk [vmem:[%s163 + $0xe8] sm:$0xff] %vm2065, %v2057
      %2096 = vst.msk [vmem:[%s163 + $0xf0] sm:$0xff] %vm2065, %v2060
      %2097 = vst.msk [vmem:[%s163 + $0xf8] sm:$0xff] %vm2065, %v2063
      %p2098 = scmp.lt.s32.totalorder %s17, 1
      %s2099 = scalar_select %p2098, %s17, 1
      %p2100 = scmp.lt.s32.totalorder %s18, 0
      %s2101 = scalar_select %p2100, %s18, 0
      %s2102 = smul.addr %s2099, 32
      %s2103 = sadd.s32 %s2101, %s2102
      %s2104 = smul.addr %s2103, 8
      %s2105 = scalar_lea.vmem %s2, %s2104
      // Predicated region
      $region33: #{tpu_custom_call.1} parent=27 // pred_check
        %p2106 = pneg %p92
      $region34: #{tpu_custom_call.1} parent=27 // pred_check_branch
        %2108 = sbr.rel (%p2106) target = $region36
      $region35: #{tpu_custom_call.1} parent=27 // pred_region
        _
      $region36: #{tpu_custom_call.1} parent=27 // pred_fallthru
        _
    $region28: #{tpu_custom_call.1} parent=5 // pred_fallthru
      _
    %p2109 = scmp.le.s32.totalorder 2, %s8
    // Predicated region
    $region37: #{tpu_custom_call.1} parent=5 // pred_check
      %p2110 = pneg %p2109
    $region38: #{tpu_custom_call.1} parent=5 // pred_check_branch
      %2112 = sbr.rel (%p2110) target = $region40
    $region39: #{tpu_custom_call.1} parent=5 // pred_region
      %s2113 = ssub.s32 %s8, 2
      // Predicated region
      $region41: #{tpu_custom_call.1} parent=39 // pred_check
        %p2114 = pneg %p98
      $region42: #{tpu_custom_call.1} parent=39 // pred_check_branch
        %2116 = sbr.rel (%p2114) target = $region44
      $region43: #{tpu_custom_call.1} parent=39 // pred_region
        %p2117 = scmp.lt.s32.totalorder %s19, 1
        %s2118 = scalar_select %p2117, %s19, 1
        %p2119 = scmp.lt.s32.totalorder %s20, 0
        %s2120 = scalar_select %p2119, %s20, 0
        %s2121 = smul.addr %s2118, 32
        %s2122 = sadd.s32 %s2120, %s2121
        %s2123 = smul.addr %s2122, 8
        %s2124 = scalar_lea.vmem %s2, %s2123
      $region44: #{tpu_custom_call.1} parent=39 // pred_fallthru
        _
    $region40: #{tpu_custom_call.1} parent=5 // pred_fallthru
      _
  $region6: #{tpu_custom_call.1} parent=0 // loop_footer
    %s12 = sadd.s32 1, %s8
  $region7: #{tpu_custom_call.1} parent=0 // loop_footer_branch
    %7 = sbr.rel target = $region3
  $region8: #{tpu_custom_call.1} parent=0 // loop_exit
    _

</llo_original>
